<compile_context>
chip_gen: v7x
topology: tpu7x:2x2x1
jax: 0.10.0
libtpu: 0.0.40
codegen_flags: <defaults>
</compile_context>

<pallas_src>
import functools

import jax
import jax.numpy as jnp
from jax import lax
from jax.experimental import pallas as pl
from jax.experimental.pallas import tpu as pltpu

BN_EPS = 1e-5
_TILE_M = 512                       # row tile for large batches (mult. of 16 for bf16)
_VMEM_SOFT_LIMIT = 32 * 1024 * 1024  # default scoped VMEM on v6e/v7x


def _round_up(x, m):
    return (x + m - 1) // m * m


# ---------------------------------------------------------------------------
# Pallas kernels
# ---------------------------------------------------------------------------
def _matmul_bias_kernel(a_ref, w_ref, b_ref, o_ref, *, relu):
    """out = maybe_relu(a @ w + b). MXU accumulate and epilogue in f32."""
    acc = jnp.dot(a_ref[...], w_ref[...], preferred_element_type=jnp.float32)
    y = acc + b_ref[...]
    if relu:
        y = jnp.maximum(y, 0.0)
    o_ref[...] = y.astype(o_ref.dtype)


def _conv3_head_kernel(p_ref, w3_ref, b3_ref, wh_ref, bh_ref, o_ref):
    """Fused conv3-as-matmul + ReLU + Linear head (two chained dots)."""
    h = jnp.dot(p_ref[...], w3_ref[...], preferred_element_type=jnp.float32)
    h = jnp.maximum(h + b3_ref[...], 0.0).astype(wh_ref.dtype)
    q = jnp.dot(h, wh_ref[...], preferred_element_type=jnp.float32)
    o_ref[...] = (q + bh_ref[...]).astype(o_ref.dtype)


# ---------------------------------------------------------------------------
# pallas_call wrappers (row-tiled grid, weights pinned, no K/N padding)
# ---------------------------------------------------------------------------
def _row_tiling(m):
    """Return (tile_m, padded_M, grid_m). Small M -> single full-array block."""
    if m <= _TILE_M:
        return m, m, 1
    mp = _round_up(m, _TILE_M)
    return _TILE_M, mp, mp // _TILE_M


def _maybe_pad_rows(a, mp):
    m = a.shape[0]
    if mp == m:
        return a
    return jnp.pad(a, ((0, mp - m), (0, 0)))


def _compiler_params(est_vmem_bytes):
    vmem_limit = None
    if est_vmem_bytes > _VMEM_SOFT_LIMIT:
        # Only raise the scoped limit if the tiles actually need it (v7x has
        # 64 MiB physical VMEM; keep portable).
        vmem_limit = 64 * 1024 * 1024
    return pltpu.CompilerParams(
        dimension_semantics=("parallel",),   # shard row tiles across TCs (v7x)
        vmem_limit_bytes=vmem_limit,
    )


def fused_matmul_bias(a, w, bias, *, relu, out_dtype):
    """maybe_relu(a @ w + bias); BN already folded into w/bias.

    a: (M, K), w: (K, N), bias: (1, N) f32. Blocks span the full K/N extents
    (no padded HBM copies); only M is row-tiled when large.
    """
    M, K = a.shape
    K2, N = w.shape
    assert K == K2 and bias.shape == (1, N)

    tm, Mp, grid_m = _row_tiling(M)
    a_in = _maybe_pad_rows(a, Mp)

    in_bytes = jnp.dtype(a.dtype).itemsize
    out_bytes = jnp.dtype(out_dtype).itemsize
    est_vmem = (2 * (tm * K * in_bytes + tm * N * out_bytes)
                + K * N * in_bytes + N * 4)
    cost = pl.CostEstimate(
        flops=int(2 * M * K * N),
        transcendentals=0,
        bytes_accessed=int(M * K * in_bytes + K * N * in_bytes
                           + N * 4 + M * N * out_bytes),
    )

    out = pl.pallas_call(
        functools.partial(_matmul_bias_kernel, relu=relu),
        out_shape=jax.ShapeDtypeStruct((Mp, N), out_dtype),
        grid=(grid_m,),
        in_specs=[
            pl.BlockSpec((tm, K), lambda i: (i, 0)),   # activations: row-tiled
            pl.BlockSpec((K, N), lambda i: (0, 0)),    # folded weights: pinned
            pl.BlockSpec((1, N), lambda i: (0, 0)),    # folded bias: pinned
        ],
        out_specs=pl.BlockSpec((tm, N), lambda i: (i, 0)),
        compiler_params=_compiler_params(est_vmem),
        cost_estimate=cost,
    )(a_in, w, bias)
    return out if Mp == M else out[:M]


def fused_conv3_head(p, w3, b3, wh, bh):
    """relu(p @ w3 + b3) @ wh + bh — conv3 (1x1 spatial output) fused with head."""
    M, K = p.shape
    K2, Hd = w3.shape
    Hd2, N = wh.shape
    assert K == K2 and Hd == Hd2

    tm, Mp, grid_m = _row_tiling(M)
    p_in = _maybe_pad_rows(p, Mp)

    in_bytes = jnp.dtype(p.dtype).itemsize
    est_vmem = (2 * (tm * K * in_bytes + tm * N * 4)
                + (K * Hd + Hd * N) * in_bytes + (Hd + N) * 4)
    cost = pl.CostEstimate(
        flops=int(2 * M * K * Hd + 2 * M * Hd * N),
        transcendentals=0,
        bytes_accessed=int(M * K * in_bytes + (K * Hd + Hd * N) * in_bytes
                           + (Hd + N) * 4 + M * N * 4),
    )

    out = pl.pallas_call(
        _conv3_head_kernel,
        out_shape=jax.ShapeDtypeStruct((Mp, N), jnp.float32),
        grid=(grid_m,),
        in_specs=[
            pl.BlockSpec((tm, K), lambda i: (i, 0)),
            pl.BlockSpec((K, Hd), lambda i: (0, 0)),
            pl.BlockSpec((1, Hd), lambda i: (0, 0)),
            pl.BlockSpec((Hd, N), lambda i: (0, 0)),
            pl.BlockSpec((1, N), lambda i: (0, 0)),
        ],
        out_specs=pl.BlockSpec((tm, N), lambda i: (i, 0)),
        compiler_params=_compiler_params(est_vmem),
        cost_estimate=cost,
    )(p_in, w3, b3, wh, bh)
    return out if Mp == M else out[:M]


# ---------------------------------------------------------------------------
# Glue: im2col patch extraction (NHWC), BN/weight folding
# ---------------------------------------------------------------------------
def _im2col(x_nhwc, k, stride):
    B, H, W, C = x_nhwc.shape
    OH = (H - k) // stride + 1
    OW = (W - k) // stride + 1
    cols = []
    for dh in range(k):
        for dw in range(k):
            cols.append(
                x_nhwc[:, dh:dh + stride * (OH - 1) + 1:stride,
                       dw:dw + stride * (OW - 1) + 1:stride, :])
    patches = jnp.stack(cols, axis=3)               # (B, OH, OW, K*K, C)
    return patches.reshape(B * OH * OW, k * k * C), OH, OW


def prepare_params(params, compute_dtype=jnp.bfloat16):
    """Fold eval-mode BN into conv weights/bias; pre-transpose the head.

    scale = gamma / sqrt(var + eps) is per output channel, so folding it into
    the weight columns is exact; bias = beta + scale * (conv_b - mean).
    Weights are stored in the matmul compute dtype, biases stay f32.
    """
    prep = {}
    for i in (1, 2, 3):
        w = params[f"conv{i}_w"]                              # (OC, IC, KH, KW)
        scale = params[f"bn{i}_g"] / jnp.sqrt(params[f"bn{i}_v"] + BN_EPS)
        bias = params[f"bn{i}_b"] + scale * (params[f"conv{i}_b"] - params[f"bn{i}_m"])
        oc = w.shape[0]
        w_mat = jnp.transpose(w, (2, 3, 1, 0)).reshape(-1, oc)  # (KH*KW*IC, OC)
        prep[f"w{i}"] = (w_mat * scale[None, :]).astype(compute_dtype)
        prep[f"b{i}"] = bias.astype(jnp.float32).reshape(1, oc)
    prep["wh"] = params["head_w"].T.astype(compute_dtype)       # (lin_in, out)
    prep["bh"] = params["head_b"].astype(jnp.float32).reshape(1, -1)
    return prep


# ---------------------------------------------------------------------------
# DQN forward (Pallas) and pure-JAX reference
# ---------------------------------------------------------------------------
def dqn_forward_pallas(x_nchw, prep, *, compute_dtype=jnp.bfloat16):
    B = x_nchw.shape[0]
    x = jnp.transpose(x_nchw, (0, 2, 3, 1)).astype(compute_dtype)   # NHWC

    p1, OH1, OW1 = _im2col(x, 5, 2)
    a1 = fused_matmul_bias(p1, prep["w1"], prep["b1"], relu=True, out_dtype=compute_dtype)
    x1 = a1.reshape(B, OH1, OW1, -1)

    p2, OH2, OW2 = _im2col(x1, 5, 2)
    a2 = fused_matmul_bias(p2, prep["w2"], prep["b2"], relu=True, out_dtype=compute_dtype)
    x2 = a2.reshape(B, OH2, OW2, -1)

    if OH2 == 5 and OW2 == 5:
        # conv3's single 5x5 window covers its whole input: the im2col row is
        # just the (kh, kw, c)-ordered flatten, and the PyTorch (C,H,W) head
        # flatten degenerates to the plain channel vector -> fuse conv3 + head.
        p3 = x2.reshape(B, -1)
        return fused_conv3_head(p3, prep["w3"], prep["b3"], prep["wh"], prep["bh"])

    # General fallback: separate conv3 kernel, then PyTorch-order flatten + head.
    p3, OH3, OW3 = _im2col(x2, 5, 2)
    a3 = fused_matmul_bias(p3, prep["w3"], prep["b3"], relu=True, out_dtype=compute_dtype)
    x3 = a3.reshape(B, OH3, OW3, -1)
    flat = jnp.transpose(x3, (0, 3, 1, 2)).reshape(B, -1)   # (C, H, W) order
    return fused_matmul_bias(flat, prep["wh"], prep["bh"], relu=False,
                             out_dtype=jnp.float32)


def dqn_forward_reference(x_nchw, params):
    """Literal eval-mode forward (conv + bias, BN with running stats, relu, head)."""
    def conv_block(x, w, b, g, be, m, v):
        dn = lax.conv_dimension_numbers(x.shape, w.shape, ("NCHW", "OIHW", "NCHW"))
        y = lax.conv_general_dilated(x, w, (2, 2), "VALID", dimension_numbers=dn)
        y = y + b[None, :, None, None]
        y = (y - m[None, :, None, None]) / jnp.sqrt(v[None, :, None, None] + BN_EPS)
        y = y * g[None, :, None, None] + be[None, :, None, None]
        return jnp.maximum(y, 0.0)

    x = conv_block(x_nchw, params["conv1_w"], params["conv1_b"],
                   params["bn1_g"], params["bn1_b"], params["bn1_m"], params["bn1_v"])
    x = conv_block(x, params["conv2_w"], params["conv2_b"],
                   params["bn2_g"], params["bn2_b"], params["bn2_m"], params["bn2_v"])
    x = conv_block(x, params["conv3_w"], params["conv3_b"],
                   params["bn3_g"], params["bn3_b"], params["bn3_m"], params["bn3_v"])
    x = x.reshape(x.shape[0], -1)
    return x @ params["head_w"].T + params["head_b"]


# ---------------------------------------------------------------------------
# Deterministic parameter initialization
# ---------------------------------------------------------------------------
def init_params(key, h, w, outputs):
    def conv_out(s, k=5, st=2):
        return (s - k) // st + 1

    convW = conv_out(conv_out(conv_out(w)))
    convH = conv_out(conv_out(conv_out(h)))
    lin_in = convW * convH * 32

    keys = jax.random.split(key, 20)
    p = {}
    p["conv1_w"] = 0.05 * jax.random.normal(keys[0], (16, 3, 5, 5), jnp.float32)
    p["conv1_b"] = 0.01 * jax.random.normal(keys[1], (16,), jnp.float32)
    p["conv2_w"] = 0.05 * jax.random.normal(keys[2], (32, 16, 5, 5), jnp.float32)
    p["conv2_b"] = 0.01 * jax.random.normal(keys[3], (32,), jnp.float32)
    p["conv3_w"] = 0.05 * jax.random.normal(keys[4], (32, 32, 5, 5), jnp.float32)
    p["conv3_b"] = 0.01 * jax.random.normal(keys[5], (32,), jnp.float32)
    for i, c in ((1, 16), (2, 32), (3, 32)):
        p[f"bn{i}_g"] = 1.0 + 0.1 * jax.random.normal(keys[5 + i], (c,), jnp.float32)
        p[f"bn{i}_b"] = 0.05 * jax.random.normal(keys[8 + i], (c,), jnp.float32)
        p[f"bn{i}_m"] = 0.02 * jax.random.normal(keys[11 + i], (c,), jnp.float32)
        p[f"bn{i}_v"] = 1.0 + 0.1 * jax.random.uniform(keys[14 + i], (c,), jnp.float32)
    p["head_w"] = 0.05 * jax.random.normal(keys[18], (outputs, lin_in), jnp.float32)
    p["head_b"] = 0.01 * jnp.arange(outputs, dtype=jnp.float32)
    return p


if __name__ == "__main__":
    B, H, W, OUT = 2, 32, 32, 2
    key = jax.random.PRNGKey(0)
    k_x, k_p = jax.random.split(key)
    x = jax.random.normal(k_x, (B, 3, H, W), jnp.float32)
    params = init_params(k_p, H, W, OUT)

    ref = jax.block_until_ready(dqn_forward_reference(x, params))

    # float32 MXU path: tight check against the literal reference.
    prep32 = prepare_params(params, jnp.float32)
    fwd32 = jax.jit(functools.partial(dqn_forward_pallas, compute_dtype=jnp.float32))
    out32 = jax.block_until_ready(fwd32(x, prep32))
    assert out32.shape == (B, OUT)
    assert jnp.allclose(out32, ref, rtol=5e-3, atol=5e-3), (out32, ref)

    # bfloat16 MXU path (perf default for v5e/v6e/v7x): looser tolerance,
    # as expected for bf16 operands with f32 accumulation.
    prep16 = prepare_params(params, jnp.bfloat16)
    fwd16 = jax.jit(functools.partial(dqn_forward_pallas, compute_dtype=jnp.bfloat16))
    out16 = jax.block_until_ready(fwd16(x, prep16))
    assert out16.shape == (B, OUT)
    assert jnp.allclose(out16.astype(jnp.float32), ref, rtol=2e-2, atol=2e-2), (out16, ref)

    print("KERNEL_OK")
</pallas_src>

<mosaic_0001>
module attributes {stable_mosaic.version = 11 : i64} {
  func.func @_matmul_bias_kernel(%arg0: i32, %arg1: memref<392x75xf32, #tpu.memory_space<vmem>>, %arg2: memref<75x16xf32, #tpu.memory_space<vmem>>, %arg3: memref<1x16xf32, #tpu.memory_space<vmem>>, %arg4: memref<392x16xf32, #tpu.memory_space<vmem>>) attributes {dimension_semantics = [#tpu.dimension_semantics<parallel>], iteration_bounds = array<i64: 1>, scalar_prefetch = 0 : i64, scratch_operands = 0 : i64, tpu.core_type = #tpu.core_type<tc>, window_params = [{transform_indices = @transform_0, window_bounds = array<i64: 392, 75>}, {pipeline_mode = #tpu.pipeline_mode<synchronous>, transform_indices = @transform_1, window_bounds = array<i64: 75, 16>}, {pipeline_mode = #tpu.pipeline_mode<synchronous>, transform_indices = @transform_2, window_bounds = array<i64: 1, 16>}, {transform_indices = @transform_3, window_bounds = array<i64: 392, 16>}]} {
    %c0 = arith.constant 0 : index
    %c0_0 = arith.constant 0 : index
    %0 = vector.load %arg1[%c0, %c0_0] : memref<392x75xf32, #tpu.memory_space<vmem>>, vector<392x75xf32>
    %c0_1 = arith.constant 0 : index
    %c0_2 = arith.constant 0 : index
    %1 = vector.load %arg2[%c0_1, %c0_2] : memref<75x16xf32, #tpu.memory_space<vmem>>, vector<75x16xf32>
    %cst = arith.constant dense<0.000000e+00> : vector<392x16xf32>
    %2 = tpu.matmul %0, %1, %cst {dimension_numbers = #tpu.dot_dimension_numbers<[1], [0], [0], [1], [0, 0, 1, 1], [], []>} : vector<392x75xf32>, vector<75x16xf32>, vector<392x16xf32> -> vector<392x16xf32>
    %c0_3 = arith.constant 0 : index
    %c0_4 = arith.constant 0 : index
    %3 = vector.load %arg3[%c0_3, %c0_4] : memref<1x16xf32, #tpu.memory_space<vmem>>, vector<1x16xf32>
    %4 = vector.broadcast %3 : vector<1x16xf32> to vector<392x16xf32>
    %5 = arith.addf %2, %4 : vector<392x16xf32>
    %cst_5 = arith.constant 0.000000e+00 : f32
    %6 = vector.broadcast %cst_5 : f32 to vector<392x16xf32>
    %7 = arith.maximumf %5, %6 : vector<392x16xf32>
    %c0_6 = arith.constant 0 : index
    %c0_7 = arith.constant 0 : index
    %8 = vector.load %arg4[%c0_6, %c0_7] : memref<392x16xf32, #tpu.memory_space<vmem>>, vector<392x16xf32>
    tpu.vector_store %arg4[%c0_6, %c0_7], %7 {strides = array<i32>} : memref<392x16xf32, #tpu.memory_space<vmem>>, vector<392x16xf32>,
    return
  }
  func.func @transform_0(%arg0: i32) -> (i32, i32) {
    %c0_i32 = arith.constant 0 : i32
    %c0_i32_0 = arith.constant 0 : i32
    return %arg0, %c0_i32 : i32, i32
  }
  func.func @transform_1(%arg0: i32) -> (i32, i32) {
    %c0_i32 = arith.constant 0 : i32
    %c0_i32_0 = arith.constant 0 : i32
    %c0_i32_1 = arith.constant 0 : i32
    return %c0_i32, %c0_i32_0 : i32, i32
  }
  func.func @transform_2(%arg0: i32) -> (i32, i32) {
    %c0_i32 = arith.constant 0 : i32
    %c0_i32_0 = arith.constant 0 : i32
    %c0_i32_1 = arith.constant 0 : i32
    return %c0_i32, %c0_i32_0 : i32, i32
  }
  func.func @transform_3(%arg0: i32) -> (i32, i32) {
    %c0_i32 = arith.constant 0 : i32
    %c0_i32_0 = arith.constant 0 : i32
    return %arg0, %c0_i32 : i32, i32
  }
}

module attributes {stable_mosaic.version = 11 : i64} {
  func.func @_matmul_bias_kernel(%arg0: i32, %arg1: memref<50x400xf32, #tpu.memory_space<vmem>>, %arg2: memref<400x32xf32, #tpu.memory_space<vmem>>, %arg3: memref<1x32xf32, #tpu.memory_space<vmem>>, %arg4: memref<50x32xf32, #tpu.memory_space<vmem>>) attributes {dimension_semantics = [#tpu.dimension_semantics<parallel>], iteration_bounds = array<i64: 1>, scalar_prefetch = 0 : i64, scratch_operands = 0 : i64, tpu.core_type = #tpu.core_type<tc>, window_params = [{transform_indices = @transform_0, window_bounds = array<i64: 50, 400>}, {pipeline_mode = #tpu.pipeline_mode<synchronous>, transform_indices = @transform_1, window_bounds = array<i64: 400, 32>}, {pipeline_mode = #tpu.pipeline_mode<synchronous>, transform_indices = @transform_2, window_bounds = array<i64: 1, 32>}, {transform_indices = @transform_3, window_bounds = array<i64: 50, 32>}]} {
    %c0 = arith.constant 0 : index
    %c0_0 = arith.constant 0 : index
    %0 = vector.load %arg1[%c0, %c0_0] : memref<50x400xf32, #tpu.memory_space<vmem>>, vector<50x400xf32>
    %c0_1 = arith.constant 0 : index
    %c0_2 = arith.constant 0 : index
    %1 = vector.load %arg2[%c0_1, %c0_2] : memref<400x32xf32, #tpu.memory_space<vmem>>, vector<400x32xf32>
    %cst = arith.constant dense<0.000000e+00> : vector<50x32xf32>
    %2 = tpu.matmul %0, %1, %cst {dimension_numbers = #tpu.dot_dimension_numbers<[1], [0], [0], [1], [0, 0, 1, 1], [], []>} : vector<50x400xf32>, vector<400x32xf32>, vector<50x32xf32> -> vector<50x32xf32>
    %c0_3 = arith.constant 0 : index
    %c0_4 = arith.constant 0 : index
    %3 = vector.load %arg3[%c0_3, %c0_4] : memref<1x32xf32, #tpu.memory_space<vmem>>, vector<1x32xf32>
    %4 = vector.broadcast %3 : vector<1x32xf32> to vector<50x32xf32>
    %5 = arith.addf %2, %4 : vector<50x32xf32>
    %cst_5 = arith.constant 0.000000e+00 : f32
    %6 = vector.broadcast %cst_5 : f32 to vector<50x32xf32>
    %7 = arith.maximumf %5, %6 : vector<50x32xf32>
    %c0_6 = arith.constant 0 : index
    %c0_7 = arith.constant 0 : index
    %8 = vector.load %arg4[%c0_6, %c0_7] : memref<50x32xf32, #tpu.memory_space<vmem>>, vector<50x32xf32>
    tpu.vector_store %arg4[%c0_6, %c0_7], %7 {strides = array<i32>} : memref<50x32xf32, #tpu.memory_space<vmem>>, vector<50x32xf32>,
    return
  }
  func.func @transform_0(%arg0: i32) -> (i32, i32) {
    %c0_i32 = arith.constant 0 : i32
    %c0_i32_0 = arith.constant 0 : i32
    return %arg0, %c0_i32 : i32, i32
  }
  func.func @transform_1(%arg0: i32) -> (i32, i32) {
    %c0_i32 = arith.constant 0 : i32
    %c0_i32_0 = arith.constant 0 : i32
    %c0_i32_1 = arith.constant 0 : i32
    return %c0_i32, %c0_i32_0 : i32, i32
  }
  func.func @transform_2(%arg0: i32) -> (i32, i32) {
    %c0_i32 = arith.constant 0 : i32
    %c0_i32_0 = arith.constant 0 : i32
    %c0_i32_1 = arith.constant 0 : i32
    return %c0_i32, %c0_i32_0 : i32, i32
  }
  func.func @transform_3(%arg0: i32) -> (i32, i32) {
    %c0_i32 = arith.constant 0 : i32
    %c0_i32_0 = arith.constant 0 : i32
    return %arg0, %c0_i32 : i32, i32
  }
}

module attributes {stable_mosaic.version = 11 : i64} {
  func.func @_conv3_head_kernel(%arg0: i32, %arg1: memref<2x800xf32, #tpu.memory_space<vmem>>, %arg2: memref<800x32xf32, #tpu.memory_space<vmem>>, %arg3: memref<1x32xf32, #tpu.memory_space<vmem>>, %arg4: memref<32x2xf32, #tpu.memory_space<vmem>>, %arg5: memref<1x2xf32, #tpu.memory_space<vmem>>, %arg6: memref<2x2xf32, #tpu.memory_space<vmem>>) attributes {dimension_semantics = [#tpu.dimension_semantics<parallel>], iteration_bounds = array<i64: 1>, scalar_prefetch = 0 : i64, scratch_operands = 0 : i64, tpu.core_type = #tpu.core_type<tc>, window_params = [{transform_indices = @transform_0, window_bounds = array<i64: 2, 800>}, {pipeline_mode = #tpu.pipeline_mode<synchronous>, transform_indices = @transform_1, window_bounds = array<i64: 800, 32>}, {pipeline_mode = #tpu.pipeline_mode<synchronous>, transform_indices = @transform_2, window_bounds = array<i64: 1, 32>}, {pipeline_mode = #tpu.pipeline_mode<synchronous>, transform_indices = @transform_3, window_bounds = array<i64: 32, 2>}, {pipeline_mode = #tpu.pipeline_mode<synchronous>, transform_indices = @transform_4, window_bounds = array<i64: 1, 2>}, {transform_indices = @transform_5, window_bounds = array<i64: 2, 2>}]} {
    %c0 = arith.constant 0 : index
    %c0_0 = arith.constant 0 : index
    %0 = vector.load %arg1[%c0, %c0_0] : memref<2x800xf32, #tpu.memory_space<vmem>>, vector<2x800xf32>
    %c0_1 = arith.constant 0 : index
    %c0_2 = arith.constant 0 : index
    %1 = vector.load %arg2[%c0_1, %c0_2] : memref<800x32xf32, #tpu.memory_space<vmem>>, vector<800x32xf32>
    %cst = arith.constant dense<0.000000e+00> : vector<2x32xf32>
    %2 = tpu.matmul %0, %1, %cst {dimension_numbers = #tpu.dot_dimension_numbers<[1], [0], [0], [1], [0, 0, 1, 1], [], []>} : vector<2x800xf32>, vector<800x32xf32>, vector<2x32xf32> -> vector<2x32xf32>
    %c0_3 = arith.constant 0 : index
    %c0_4 = arith.constant 0 : index
    %3 = vector.load %arg3[%c0_3, %c0_4] : memref<1x32xf32, #tpu.memory_space<vmem>>, vector<1x32xf32>
    %4 = vector.broadcast %3 : vector<1x32xf32> to vector<2x32xf32>
    %5 = arith.addf %2, %4 : vector<2x32xf32>
    %cst_5 = arith.constant 0.000000e+00 : f32
    %6 = vector.broadcast %cst_5 : f32 to vector<2x32xf32>
    %7 = arith.maximumf %5, %6 : vector<2x32xf32>
    %c0_6 = arith.constant 0 : index
    %c0_7 = arith.constant 0 : index
    %8 = vector.load %arg4[%c0_6, %c0_7] : memref<32x2xf32, #tpu.memory_space<vmem>>, vector<32x2xf32>
    %cst_8 = arith.constant dense<0.000000e+00> : vector<2x2xf32>
    %9 = tpu.matmul %7, %8, %cst_8 {dimension_numbers = #tpu.dot_dimension_numbers<[1], [0], [0], [1], [0, 0, 1, 1], [], []>} : vector<2x32xf32>, vector<32x2xf32>, vector<2x2xf32> -> vector<2x2xf32>
    %c0_9 = arith.constant 0 : index
    %c0_10 = arith.constant 0 : index
    %10 = vector.load %arg5[%c0_9, %c0_10] : memref<1x2xf32, #tpu.memory_space<vmem>>, vector<1x2xf32>
    %11 = vector.broadcast %10 : vector<1x2xf32> to vector<2x2xf32>
    %12 = arith.addf %9, %11 : vector<2x2xf32>
    %c0_11 = arith.constant 0 : index
    %c0_12 = arith.constant 0 : index
    %13 = vector.load %arg6[%c0_11, %c0_12] : memref<2x2xf32, #tpu.memory_space<vmem>>, vector<2x2xf32>
    tpu.vector_store %arg6[%c0_11, %c0_12], %12 {strides = array<i32>} : memref<2x2xf32, #tpu.memory_space<vmem>>, vector<2x2xf32>,
    return
  }
  func.func @transform_0(%arg0: i32) -> (i32, i32) {
    %c0_i32 = arith.constant 0 : i32
    %c0_i32_0 = arith.constant 0 : i32
    return %arg0, %c0_i32 : i32, i32
  }
  func.func @transform_1(%arg0: i32) -> (i32, i32) {
    %c0_i32 = arith.constant 0 : i32
    %c0_i32_0 = arith.constant 0 : i32
    %c0_i32_1 = arith.constant 0 : i32
    return %c0_i32, %c0_i32_0 : i32, i32
  }
  func.func @transform_2(%arg0: i32) -> (i32, i32) {
    %c0_i32 = arith.constant 0 : i32
    %c0_i32_0 = arith.constant 0 : i32
    %c0_i32_1 = arith.constant 0 : i32
    return %c0_i32, %c0_i32_0 : i32, i32
  }
  func.func @transform_3(%arg0: i32) -> (i32, i32) {
    %c0_i32 = arith.constant 0 : i32
    %c0_i32_0 = arith.constant 0 : i32
    %c0_i32_1 = arith.constant 0 : i32
    return %c0_i32, %c0_i32_0 : i32, i32
  }
  func.func @transform_4(%arg0: i32) -> (i32, i32) {
    %c0_i32 = arith.constant 0 : i32
    %c0_i32_0 = arith.constant 0 : i32
    %c0_i32_1 = arith.constant 0 : i32
    return %c0_i32, %c0_i32_0 : i32, i32
  }
  func.func @transform_5(%arg0: i32) -> (i32, i32) {
    %c0_i32 = arith.constant 0 : i32
    %c0_i32_0 = arith.constant 0 : i32
    return %arg0, %c0_i32 : i32, i32
  }
}

</mosaic_0001>

<llo_original>
// kernel: dqn_forward_pallas.3
$region0: #{dqn_forward_pallas.3}
  #allocation0 [shape = 'u32[]', space=smem, size = 0x4, offset = 0x4, fixed_abs, tag = 'smem constant byte address 0x4 - core index']
  #allocation1 [shape = 'u32[144,128]{1,0:T(1,128)}', space=vmem, size = 0x12000, scoped, tag = 'internal scratch']
  %s0 = inlined_call_operand.vmem [shape: f32[392,75], index: 0, kind: input, shape index: {}]
  %s1 = inlined_call_operand.vmem [shape: f32[75,16], index: 1, kind: input, shape index: {}]
  %s2 = inlined_call_operand.vmem [shape: f32[1,16], index: 2, kind: input, shape index: {}]
  %s3 = inlined_call_operand.vmem [shape: f32[392,16], index: 3, kind: output, shape index: {}]
  %s4 = sld [smem:[#allocation0]]
  $region22: #{dqn_forward_pallas.3} parent=0
    _
  %s6 = ssub.s32 1, %s4
  %s7 = scalar_select 0, %s6, %s4
  // Predicated region
  $region2: #{dqn_forward_pallas.3} parent=0 // pred_check
    _
  $region3: #{dqn_forward_pallas.3} parent=0 // pred_check_branch
    %9 = sbr.rel (0) target = $region5
  $region4: #{dqn_forward_pallas.3} parent=0 // pred_region
    _
  $region5: #{dqn_forward_pallas.3} parent=0 // pred_fallthru
    _
  // Predicated region
  $region6: #{dqn_forward_pallas.3} parent=0 // pred_check
    _
  $region7: #{dqn_forward_pallas.3} parent=0 // pred_check_branch
    %11 = sbr.rel (0) target = $region9
  $region8: #{dqn_forward_pallas.3} parent=0 // pred_region
    _
  $region9: #{dqn_forward_pallas.3} parent=0 // pred_fallthru
    _
  // Predicated region
  $region10: #{dqn_forward_pallas.3} parent=0 // pred_check
    _
  $region11: #{dqn_forward_pallas.3} parent=0 // pred_check_branch
    %13 = sbr.rel (0) target = $region13
  $region12: #{dqn_forward_pallas.3} parent=0 // pred_region
    _
  $region13: #{dqn_forward_pallas.3} parent=0 // pred_fallthru
    _
  %v14 = vld [vmem:[%s0] sm:$0xff]
  %v15 = vld [vmem:[%s0 + $0x8] sm:$0xff]
  %v16 = vld [vmem:[%s0 + $0x10] sm:$0xff]
  %v17 = vld [vmem:[%s0 + $0x18] sm:$0xff]
  %v18 = vld [vmem:[%s0 + $0x20] sm:$0xff]
  %v19 = vld [vmem:[%s0 + $0x28] sm:$0xff]
  %v20 = vld [vmem:[%s0 + $0x30] sm:$0xff]
  %v21 = vld [vmem:[%s0 + $0x38] sm:$0xff]
  %v22 = vld [vmem:[%s0 + $0x40] sm:$0xff]
  %v23 = vld [vmem:[%s0 + $0x48] sm:$0xff]
  %v24 = vld [vmem:[%s0 + $0x50] sm:$0xff]
  %v25 = vld [vmem:[%s0 + $0x58] sm:$0xff]
  %v26 = vld [vmem:[%s0 + $0x60] sm:$0xff]
  %v27 = vld [vmem:[%s0 + $0x68] sm:$0xff]
  %v28 = vld [vmem:[%s0 + $0x70] sm:$0xff]
  %v29 = vld [vmem:[%s0 + $0x78] sm:$0xff]
  %v30 = vld [vmem:[%s0 + $0x80] sm:$0xff]
  %v31 = vld [vmem:[%s0 + $0x88] sm:$0xff]
  %v32 = vld [vmem:[%s0 + $0x90] sm:$0xff]
  %v33 = vld [vmem:[%s0 + $0x98] sm:$0xff]
  %v34 = vld [vmem:[%s0 + $0xa0] sm:$0xff]
  %v35 = vld [vmem:[%s0 + $0xa8] sm:$0xff]
  %v36 = vld [vmem:[%s0 + $0xb0] sm:$0xff]
  %v37 = vld [vmem:[%s0 + $0xb8] sm:$0xff]
  %v38 = vld [vmem:[%s0 + $0xc0] sm:$0xff]
  %v39 = vld [vmem:[%s0 + $0xc8] sm:$0xff]
  %v40 = vld [vmem:[%s0 + $0xd0] sm:$0xff]
  %v41 = vld [vmem:[%s0 + $0xd8] sm:$0xff]
  %v42 = vld [vmem:[%s0 + $0xe0] sm:$0xff]
  %v43 = vld [vmem:[%s0 + $0xe8] sm:$0xff]
  %v44 = vld [vmem:[%s0 + $0xf0] sm:$0xff]
  %v45 = vld [vmem:[%s0 + $0xf8] sm:$0xff]
  %v46 = vld [vmem:[%s0 + $0x100] sm:$0xff]
  %v47 = vld [vmem:[%s0 + $0x108] sm:$0xff]
  %v48 = vld [vmem:[%s0 + $0x110] sm:$0xff]
  %v49 = vld [vmem:[%s0 + $0x118] sm:$0xff]
  %v50 = vld [vmem:[%s0 + $0x120] sm:$0xff]
  %v51 = vld [vmem:[%s0 + $0x128] sm:$0xff]
  %v52 = vld [vmem:[%s0 + $0x130] sm:$0xff]
  %v53 = vld [vmem:[%s0 + $0x138] sm:$0xff]
  %v54 = vld [vmem:[%s0 + $0x140] sm:$0xff]
  %v55 = vld [vmem:[%s0 + $0x148] sm:$0xff]
  %v56 = vld [vmem:[%s0 + $0x150] sm:$0xff]
  %v57 = vld [vmem:[%s0 + $0x158] sm:$0xff]
  %v58 = vld [vmem:[%s0 + $0x160] sm:$0xff]
  %v59 = vld [vmem:[%s0 + $0x168] sm:$0xff]
  %v60 = vld [vmem:[%s0 + $0x170] sm:$0xff]
  %v61 = vld [vmem:[%s0 + $0x178] sm:$0xff]
  %v62 = vld [vmem:[%s0 + $0x180] sm:$0xff]
  %v63 = vld [vmem:[%s1] sm:$0xff]
  %v64 = vld [vmem:[%s1 + $0x8] sm:$0xff]
  %v65 = vld [vmem:[%s1 + $0x10] sm:$0xff]
  %v66 = vld [vmem:[%s1 + $0x18] sm:$0xff]
  %v67 = vld [vmem:[%s1 + $0x20] sm:$0xff]
  %v68 = vld [vmem:[%s1 + $0x28] sm:$0xff]
  %v69 = vld [vmem:[%s1 + $0x30] sm:$0xff]
  %v70 = vld [vmem:[%s1 + $0x38] sm:$0xff]
  %v71 = vld [vmem:[%s1 + $0x40] sm:$0xff]
  %v72 = vld [vmem:[%s1 + $0x48] sm:$0x7]
  %v73 = vld [vmem:[%s2] sm:$0x1]
  %v75 = vlaneseq
  %v76 = vshrl.u32 %v75, 7
  %v77 = vsub.s32 0, %v76
  %v78 = vrot.slane %v73, %v77
  %vm80 = vcmask 613376
  %v82 = vsel %vm80, %v14, 0
  %v85 = vsel %vm80, %v15, 0
  %v88 = vsel %vm80, %v16, 0
  %v91 = vsel %vm80, %v17, 0
  %v94 = vsel %vm80, %v18, 0
  %v97 = vsel %vm80, %v19, 0
  %v100 = vsel %vm80, %v20, 0
  %v103 = vsel %vm80, %v21, 0
  %v106 = vsel %vm80, %v22, 0
  %v109 = vsel %vm80, %v23, 0
  %v112 = vsel %vm80, %v24, 0
  %v115 = vsel %vm80, %v25, 0
  %v118 = vsel %vm80, %v26, 0
  %v121 = vsel %vm80, %v27, 0
  %v124 = vsel %vm80, %v28, 0
  %v127 = vsel %vm80, %v29, 0
  %v130 = vsel %vm80, %v30, 0
  %v133 = vsel %vm80, %v31, 0
  %v136 = vsel %vm80, %v32, 0
  %v139 = vsel %vm80, %v33, 0
  %v142 = vsel %vm80, %v34, 0
  %v145 = vsel %vm80, %v35, 0
  %v148 = vsel %vm80, %v36, 0
  %v151 = vsel %vm80, %v37, 0
  %v154 = vsel %vm80, %v38, 0
  %v157 = vsel %vm80, %v39, 0
  %v160 = vsel %vm80, %v40, 0
  %v163 = vsel %vm80, %v41, 0
  %v166 = vsel %vm80, %v42, 0
  %v169 = vsel %vm80, %v43, 0
  %v172 = vsel %vm80, %v44, 0
  %v175 = vsel %vm80, %v45, 0
  %v178 = vsel %vm80, %v46, 0
  %v181 = vsel %vm80, %v47, 0
  %v184 = vsel %vm80, %v48, 0
  %v187 = vsel %vm80, %v49, 0
  %v190 = vsel %vm80, %v50, 0
  %v193 = vsel %vm80, %v51, 0
  %v196 = vsel %vm80, %v52, 0
  %v199 = vsel %vm80, %v53, 0
  %v202 = vsel %vm80, %v54, 0
  %v205 = vsel %vm80, %v55, 0
  %v208 = vsel %vm80, %v56, 0
  %v211 = vsel %vm80, %v57, 0
  %v214 = vsel %vm80, %v58, 0
  %v217 = vsel %vm80, %v59, 0
  %v220 = vsel %vm80, %v60, 0
  %v223 = vsel %vm80, %v61, 0
  %v226 = vsel %vm80, %v62, 0
  %vm228 = vcmask 1042432
  %v230 = vsel %vm228, %v72, 0
  %232 = vmatprep.subr.mxu0 0.0
  %233 = vmatpush1.msra.mxu0 %v63
  %234 = vmatprep.subr.mxu0 0.0
  %235 = vmatpush1.msra.mxu0 %v64
  %236 = vmatprep.subr.mxu0 0.0
  %237 = vmatpush1.msra.mxu0 %v65
  %238 = vmatprep.subr.mxu0 0.0
  %239 = vmatpush1.msra.mxu0 %v66
  %240 = vmatprep.subr.mxu0 0.0
  %241 = vmatpush1.msra.mxu0 %v67
  %242 = vmatprep.subr.mxu0 0.0
  %243 = vmatpush1.msra.mxu0 %v68
  %244 = vmatprep.subr.mxu0 0.0
  %245 = vmatpush1.msra.mxu0 %v69
  %246 = vmatprep.subr.mxu0 0.0
  %247 = vmatpush1.msra.mxu0 %v70
  %248 = vmatprep.subr.mxu0 0.0
  %249 = vmatpush1.msra.mxu0 %v71
  %250 = vmatprep.subr.mxu0 0.0
  %251 = vmatpush1.msra.mxu0 %v230
  %252 = vmatprep.subr.mxu0 0.0
  %253 = vmatpush1.msra.mxu0 0.0
  %254 = vmatprep.subr.mxu0 0.0
  %255 = vmatpush1.msra.mxu0 0.0
  %256 = vmatprep.subr.mxu0 0.0
  %257 = vmatpush1.msra.mxu0 0.0
  %258 = vmatprep.subr.mxu0 0.0
  %259 = vmatpush1.msra.mxu0 0.0
  %260 = vmatprep.subr.mxu0 0.0
  %261 = vmatpush1.msra.mxu0 0.0
  %262 = vmatprep.subr.mxu0 0.0
  %263 = vmatpush1.msra.mxu0 0.0
  %264 = vmatprep.subr.mxu0 0.0
  %265 = vmatpush1.msra.mxu0 0.0
  %266 = vmatprep.subr.mxu0 0.0
  %267 = vmatpush1.msra.mxu0 0.0
  %268 = vmatprep.subr.mxu0 0.0
  %269 = vmatpush1.msra.mxu0 0.0
  %270 = vmatprep.subr.mxu0 0.0
  %271 = vmatpush1.msra.mxu0 0.0
  %272 = vmatprep.subr.mxu0 0.0
  %273 = vmatpush1.msra.mxu0 0.0
  %274 = vmatprep.subr.mxu0 0.0
  %275 = vmatpush1.msra.mxu0 0.0
  %276 = vmatprep.subr.mxu0 0.0
  %277 = vmatpush1.msra.mxu0 0.0
  %278 = vmatprep.subr.mxu0 0.0
  %279 = vmatpush1.msra.mxu0 0.0
  %280 = vmatprep.subr.mxu0 0.0
  %281 = vmatpush1.msra.mxu0 0.0
  %282 = vmatprep.subr.mxu0 0.0
  %283 = vmatpush1.msra.mxu0 0.0
  %284 = vmatprep.subr.mxu0 0.0
  %285 = vmatpush1.msra.mxu0 0.0
  %286 = vmatprep.subr.mxu0 0.0
  %287 = vmatpush1.msra.mxu0 0.0
  %288 = vmatprep.subr.mxu0 0.0
  %289 = vmatpush1.msra.mxu0 0.0
  %290 = vmatprep.subr.mxu0 0.0
  %291 = vmatpush1.msra.mxu0 0.0
  %292 = vmatprep.subr.mxu0 0.0
  %293 = vmatpush1.msra.mxu0 0.0
  %294 = vmatprep.subr.mxu0 0.0
  %295 = vmatpush1.msra.mxu0 0.0
  %296 = vmatprep.mubr.f32.mxu0 0.0
  %297 = vmatmul.mubr.f32.gmra.mrb[0].mxu0 %v82
  %v298 = vpop.f32.mrb[0].mxu0
  %v299 = vadd.f32 %v78, %v298
  %v300 = vpop.f32.mrb[0].mxu0
  %301 = vmatprep.mubr.f32.mxu0 0.0
  %302 = vmatmul.mubr.f32.gmra.mrb[0].mxu0 %v85
  %v303 = vpop.f32.mrb[0].mxu0
  %v304 = vadd.f32 %v78, %v303
  %v305 = vpop.f32.mrb[0].mxu0
  %306 = vmatprep.mubr.f32.mxu0 0.0
  %307 = vmatmul.mubr.f32.gmra.mrb[0].mxu0 %v88
  %v308 = vpop.f32.mrb[0].mxu0
  %v309 = vadd.f32 %v78, %v308
  %v310 = vpop.f32.mrb[0].mxu0
  %311 = vmatprep.mubr.f32.mxu0 0.0
  %312 = vmatmul.mubr.f32.gmra.mrb[0].mxu0 %v91
  %v313 = vpop.f32.mrb[0].mxu0
  %v314 = vadd.f32 %v78, %v313
  %v315 = vpop.f32.mrb[0].mxu0
  %316 = vmatprep.mubr.f32.mxu0 0.0
  %317 = vmatmul.mubr.f32.gmra.mrb[0].mxu0 %v94
  %v318 = vpop.f32.mrb[0].mxu0
  %v319 = vadd.f32 %v78, %v318
  %v320 = vpop.f32.mrb[0].mxu0
  %321 = vmatprep.mubr.f32.mxu0 0.0
  %322 = vmatmul.mubr.f32.gmra.mrb[0].mxu0 %v97
  %v323 = vpop.f32.mrb[0].mxu0
  %v324 = vadd.f32 %v78, %v323
  %v325 = vpop.f32.mrb[0].mxu0
  %326 = vmatprep.mubr.f32.mxu0 0.0
  %327 = vmatmul.mubr.f32.gmra.mrb[0].mxu0 %v100
  %v328 = vpop.f32.mrb[0].mxu0
  %v329 = vadd.f32 %v78, %v328
  %v330 = vpop.f32.mrb[0].mxu0
  %331 = vmatprep.mubr.f32.mxu0 0.0
  %332 = vmatmul.mubr.f32.gmra.mrb[0].mxu0 %v103
  %v333 = vpop.f32.mrb[0].mxu0
  %v334 = vadd.f32 %v78, %v333
  %v335 = vpop.f32.mrb[0].mxu0
  %336 = vmatprep.mubr.f32.mxu0 0.0
  %337 = vmatmul.mubr.f32.gmra.mrb[0].mxu0 %v106
  %v338 = vpop.f32.mrb[0].mxu0
  %v339 = vadd.f32 %v78, %v338
  %v340 = vpop.f32.mrb[0].mxu0
  %341 = vmatprep.mubr.f32.mxu0 0.0
  %342 = vmatmul.mubr.f32.gmra.mrb[0].mxu0 %v109
  %v343 = vpop.f32.mrb[0].mxu0
  %v344 = vadd.f32 %v78, %v343
  %v345 = vpop.f32.mrb[0].mxu0
  %346 = vmatprep.mubr.f32.mxu0 0.0
  %347 = vmatmul.mubr.f32.gmra.mrb[0].mxu0 %v112
  %v348 = vpop.f32.mrb[0].mxu0
  %v349 = vadd.f32 %v78, %v348
  %v350 = vpop.f32.mrb[0].mxu0
  %351 = vmatprep.mubr.f32.mxu0 0.0
  %352 = vmatmul.mubr.f32.gmra.mrb[0].mxu0 %v115
  %v353 = vpop.f32.mrb[0].mxu0
  %v354 = vadd.f32 %v78, %v353
  %v355 = vpop.f32.mrb[0].mxu0
  %356 = vmatprep.mubr.f32.mxu0 0.0
  %357 = vmatmul.mubr.f32.gmra.mrb[0].mxu0 %v118
  %v358 = vpop.f32.mrb[0].mxu0
  %v359 = vadd.f32 %v78, %v358
  %v360 = vpop.f32.mrb[0].mxu0
  %361 = vmatprep.mubr.f32.mxu0 0.0
  %362 = vmatmul.mubr.f32.gmra.mrb[0].mxu0 %v121
  %v363 = vpop.f32.mrb[0].mxu0
  %v364 = vadd.f32 %v78, %v363
  %v365 = vpop.f32.mrb[0].mxu0
  %366 = vmatprep.mubr.f32.mxu0 0.0
  %367 = vmatmul.mubr.f32.gmra.mrb[0].mxu0 %v124
  %v368 = vpop.f32.mrb[0].mxu0
  %v369 = vadd.f32 %v78, %v368
  %v370 = vpop.f32.mrb[0].mxu0
  %371 = vmatprep.mubr.f32.mxu0 0.0
  %372 = vmatmul.mubr.f32.gmra.mrb[0].mxu0 %v127
  %v373 = vpop.f32.mrb[0].mxu0
  %v374 = vadd.f32 %v78, %v373
  %v375 = vpop.f32.mrb[0].mxu0
  %376 = vmatprep.mubr.f32.mxu0 0.0
  %377 = vmatmul.mubr.f32.gmra.mrb[0].mxu0 %v130
  %v378 = vpop.f32.mrb[0].mxu0
  %v379 = vadd.f32 %v78, %v378
  %v380 = vpop.f32.mrb[0].mxu0
  %381 = vmatprep.mubr.f32.mxu0 0.0
  %382 = vmatmul.mubr.f32.gmra.mrb[0].mxu0 %v133
  %v383 = vpop.f32.mrb[0].mxu0
  %v384 = vadd.f32 %v78, %v383
  %v385 = vpop.f32.mrb[0].mxu0
  %386 = vmatprep.mubr.f32.mxu0 0.0
  %387 = vmatmul.mubr.f32.gmra.mrb[0].mxu0 %v136
  %v388 = vpop.f32.mrb[0].mxu0
  %v389 = vadd.f32 %v78, %v388
  %v390 = vpop.f32.mrb[0].mxu0
  %391 = vmatprep.mubr.f32.mxu0 0.0
  %392 = vmatmul.mubr.f32.gmra.mrb[0].mxu0 %v139
  %v393 = vpop.f32.mrb[0].mxu0
  %v394 = vadd.f32 %v78, %v393
  %v395 = vpop.f32.mrb[0].mxu0
  %396 = vmatprep.mubr.f32.mxu0 0.0
  %397 = vmatmul.mubr.f32.gmra.mrb[0].mxu0 %v142
  %v398 = vpop.f32.mrb[0].mxu0
  %v399 = vadd.f32 %v78, %v398
  %v400 = vpop.f32.mrb[0].mxu0
  %401 = vmatprep.mubr.f32.mxu0 0.0
  %402 = vmatmul.mubr.f32.gmra.mrb[0].mxu0 %v145
  %v403 = vpop.f32.mrb[0].mxu0
  %v404 = vadd.f32 %v78, %v403
  %v405 = vpop.f32.mrb[0].mxu0
  %406 = vmatprep.mubr.f32.mxu0 0.0
  %407 = vmatmul.mubr.f32.gmra.mrb[0].mxu0 %v148
  %v408 = vpop.f32.mrb[0].mxu0
  %v409 = vadd.f32 %v78, %v408
  %v410 = vpop.f32.mrb[0].mxu0
  %411 = vmatprep.mubr.f32.mxu0 0.0
  %412 = vmatmul.mubr.f32.gmra.mrb[0].mxu0 %v151
  %v413 = vpop.f32.mrb[0].mxu0
  %v414 = vadd.f32 %v78, %v413
  %v415 = vpop.f32.mrb[0].mxu0
  %416 = vmatprep.mubr.f32.mxu0 0.0
  %417 = vmatmul.mubr.f32.gmra.mrb[0].mxu0 %v154
  %v418 = vpop.f32.mrb[0].mxu0
  %v419 = vadd.f32 %v78, %v418
  %v420 = vpop.f32.mrb[0].mxu0
  %421 = vmatprep.mubr.f32.mxu0 0.0
  %422 = vmatmul.mubr.f32.gmra.mrb[0].mxu0 %v157
  %v423 = vpop.f32.mrb[0].mxu0
  %v424 = vadd.f32 %v78, %v423
  %v425 = vpop.f32.mrb[0].mxu0
  %426 = vmatprep.mubr.f32.mxu0 0.0
  %427 = vmatmul.mubr.f32.gmra.mrb[0].mxu0 %v160
  %v428 = vpop.f32.mrb[0].mxu0
  %v429 = vadd.f32 %v78, %v428
  %v430 = vpop.f32.mrb[0].mxu0
  %431 = vmatprep.mubr.f32.mxu0 0.0
  %432 = vmatmul.mubr.f32.gmra.mrb[0].mxu0 %v163
  %v433 = vpop.f32.mrb[0].mxu0
  %v434 = vadd.f32 %v78, %v433
  %v435 = vpop.f32.mrb[0].mxu0
  %436 = vmatprep.mubr.f32.mxu0 0.0
  %437 = vmatmul.mubr.f32.gmra.mrb[0].mxu0 %v166
  %v438 = vpop.f32.mrb[0].mxu0
  %v439 = vadd.f32 %v78, %v438
  %v440 = vpop.f32.mrb[0].mxu0
  %441 = vmatprep.mubr.f32.mxu0 0.0
  %442 = vmatmul.mubr.f32.gmra.mrb[0].mxu0 %v169
  %v443 = vpop.f32.mrb[0].mxu0
  %v444 = vadd.f32 %v78, %v443
  %v445 = vpop.f32.mrb[0].mxu0
  %446 = vmatprep.mubr.f32.mxu0 0.0
  %447 = vmatmul.mubr.f32.gmra.mrb[0].mxu0 %v172
  %v448 = vpop.f32.mrb[0].mxu0
  %v449 = vadd.f32 %v78, %v448
  %v450 = vpop.f32.mrb[0].mxu0
  %451 = vmatprep.mubr.f32.mxu0 0.0
  %452 = vmatmul.mubr.f32.gmra.mrb[0].mxu0 %v175
  %v453 = vpop.f32.mrb[0].mxu0
  %v454 = vadd.f32 %v78, %v453
  %v455 = vpop.f32.mrb[0].mxu0
  %456 = vmatprep.mubr.f32.mxu0 0.0
  %457 = vmatmul.mubr.f32.gmra.mrb[0].mxu0 %v178
  %v458 = vpop.f32.mrb[0].mxu0
  %v459 = vadd.f32 %v78, %v458
  %v460 = vpop.f32.mrb[0].mxu0
  %461 = vmatprep.mubr.f32.mxu0 0.0
  %462 = vmatmul.mubr.f32.gmra.mrb[0].mxu0 %v181
  %v463 = vpop.f32.mrb[0].mxu0
  %v464 = vadd.f32 %v78, %v463
  %v465 = vpop.f32.mrb[0].mxu0
  %466 = vmatprep.mubr.f32.mxu0 0.0
  %467 = vmatmul.mubr.f32.gmra.mrb[0].mxu0 %v184
  %v468 = vpop.f32.mrb[0].mxu0
  %v469 = vadd.f32 %v78, %v468
  %v470 = vpop.f32.mrb[0].mxu0
  %471 = vmatprep.mubr.f32.mxu0 0.0
  %472 = vmatmul.mubr.f32.gmra.mrb[0].mxu0 %v187
  %v473 = vpop.f32.mrb[0].mxu0
  %v474 = vadd.f32 %v78, %v473
  %v475 = vpop.f32.mrb[0].mxu0
  %476 = vmatprep.mubr.f32.mxu0 0.0
  %477 = vmatmul.mubr.f32.gmra.mrb[0].mxu0 %v190
  %v478 = vpop.f32.mrb[0].mxu0
  %v479 = vadd.f32 %v78, %v478
  %v480 = vpop.f32.mrb[0].mxu0
  %481 = vmatprep.mubr.f32.mxu0 0.0
  %482 = vmatmul.mubr.f32.gmra.mrb[0].mxu0 %v193
  %v483 = vpop.f32.mrb[0].mxu0
  %v484 = vadd.f32 %v78, %v483
  %v485 = vpop.f32.mrb[0].mxu0
  %486 = vmatprep.mubr.f32.mxu0 0.0
  %487 = vmatmul.mubr.f32.gmra.mrb[0].mxu0 %v196
  %v488 = vpop.f32.mrb[0].mxu0
  %v489 = vadd.f32 %v78, %v488
  %v490 = vpop.f32.mrb[0].mxu0
  %491 = vmatprep.mubr.f32.mxu0 0.0
  %492 = vmatmul.mubr.f32.gmra.mrb[0].mxu0 %v199
  %v493 = vpop.f32.mrb[0].mxu0
  %v494 = vadd.f32 %v78, %v493
  %v495 = vpop.f32.mrb[0].mxu0
  %496 = vmatprep.mubr.f32.mxu0 0.0
  %497 = vmatmul.mubr.f32.gmra.mrb[0].mxu0 %v202
  %v498 = vpop.f32.mrb[0].mxu0
  %v499 = vadd.f32 %v78, %v498
  %v500 = vpop.f32.mrb[0].mxu0
  %501 = vmatprep.mubr.f32.mxu0 0.0
  %502 = vmatmul.mubr.f32.gmra.mrb[0].mxu0 %v205
  %v503 = vpop.f32.mrb[0].mxu0
  %v504 = vadd.f32 %v78, %v503
  %v505 = vpop.f32.mrb[0].mxu0
  %506 = vmatprep.mubr.f32.mxu0 0.0
  %507 = vmatmul.mubr.f32.gmra.mrb[0].mxu0 %v208
  %v508 = vpop.f32.mrb[0].mxu0
  %v509 = vadd.f32 %v78, %v508
  %v510 = vpop.f32.mrb[0].mxu0
  %511 = vmatprep.mubr.f32.mxu0 0.0
  %512 = vmatmul.mubr.f32.gmra.mrb[0].mxu0 %v211
  %v513 = vpop.f32.mrb[0].mxu0
  %v514 = vadd.f32 %v78, %v513
  %v515 = vpop.f32.mrb[0].mxu0
  %516 = vmatprep.mubr.f32.mxu0 0.0
  %517 = vmatmul.mubr.f32.gmra.mrb[0].mxu0 %v214
  %v518 = vpop.f32.mrb[0].mxu0
  %v519 = vadd.f32 %v78, %v518
  %v520 = vpop.f32.mrb[0].mxu0
  %521 = vmatprep.mubr.f32.mxu0 0.0
  %522 = vmatmul.mubr.f32.gmra.mrb[0].mxu0 %v217
  %v523 = vpop.f32.mrb[0].mxu0
  %v524 = vadd.f32 %v78, %v523
  %v525 = vpop.f32.mrb[0].mxu0
  %526 = vmatprep.mubr.f32.mxu0 0.0
  %527 = vmatmul.mubr.f32.gmra.mrb[0].mxu0 %v220
  %v528 = vpop.f32.mrb[0].mxu0
  %v529 = vadd.f32 %v78, %v528
  %v530 = vpop.f32.mrb[0].mxu0
  %531 = vmatprep.mubr.f32.mxu0 0.0
  %532 = vmatmul.mubr.f32.gmra.mrb[0].mxu0 %v223
  %v533 = vpop.f32.mrb[0].mxu0
  %v534 = vadd.f32 %v78, %v533
  %v535 = vpop.f32.mrb[0].mxu0
  %536 = vmatprep.mubr.f32.mxu0 0.0
  %537 = vmatmul.mubr.f32.gmra.mrb[0].mxu0 %v226
  %v538 = vpop.f32.mrb[0].mxu0
  %v539 = vadd.f32 %v78, %v538
  %v540 = vpop.f32.mrb[0].mxu0
  %541 = vdwg.mxu0
  %v542 = vmax.f32 %v299, 0.0
  %v543 = vmax.f32 %v304, 0.0
  %v544 = vmax.f32 %v309, 0.0
  %v545 = vmax.f32 %v314, 0.0
  %v546 = vmax.f32 %v319, 0.0
  %v547 = vmax.f32 %v324, 0.0
  %v548 = vmax.f32 %v329, 0.0
  %v549 = vmax.f32 %v334, 0.0
  %v550 = vmax.f32 %v339, 0.0
  %v551 = vmax.f32 %v344, 0.0
  %v552 = vmax.f32 %v349, 0.0
  %v553 = vmax.f32 %v354, 0.0
  %v554 = vmax.f32 %v359, 0.0
  %v555 = vmax.f32 %v364, 0.0
  %v556 = vmax.f32 %v369, 0.0
  %v557 = vmax.f32 %v374, 0.0
  %v558 = vmax.f32 %v379, 0.0
  %v559 = vmax.f32 %v384, 0.0
  %v560 = vmax.f32 %v389, 0.0
  %v561 = vmax.f32 %v394, 0.0
  %v562 = vmax.f32 %v399, 0.0
  %v563 = vmax.f32 %v404, 0.0
  %v564 = vmax.f32 %v409, 0.0
  %v565 = vmax.f32 %v414, 0.0
  %v566 = vmax.f32 %v419, 0.0
  %v567 = vmax.f32 %v424, 0.0
  %v568 = vmax.f32 %v429, 0.0
  %v569 = vmax.f32 %v434, 0.0
  %v570 = vmax.f32 %v439, 0.0
  %v571 = vmax.f32 %v444, 0.0
  %v572 = vmax.f32 %v449, 0.0
  %v573 = vmax.f32 %v454, 0.0
  %v574 = vmax.f32 %v459, 0.0
  %v575 = vmax.f32 %v464, 0.0
  %v576 = vmax.f32 %v469, 0.0
  %v577 = vmax.f32 %v474, 0.0
  %v578 = vmax.f32 %v479, 0.0
  %v579 = vmax.f32 %v484, 0.0
  %v580 = vmax.f32 %v489, 0.0
  %v581 = vmax.f32 %v494, 0.0
  %v582 = vmax.f32 %v499, 0.0
  %v583 = vmax.f32 %v504, 0.0
  %v584 = vmax.f32 %v509, 0.0
  %v585 = vmax.f32 %v514, 0.0
  %v586 = vmax.f32 %v519, 0.0
  %v587 = vmax.f32 %v524, 0.0
  %v588 = vmax.f32 %v529, 0.0
  %v589 = vmax.f32 %v534, 0.0
  %v590 = vmax.f32 %v539, 0.0
  %vm591 = vcmask 130048
  %592 = vst.msk [vmem:[%s3] sm:$0xff] %vm591, %v542
  %593 = vst.msk [vmem:[%s3 + $0x8] sm:$0xff] %vm591, %v543
  %594 = vst.msk [vmem:[%s3 + $0x10] sm:$0xff] %vm591, %v544
  %595 = vst.msk [vmem:[%s3 + $0x18] sm:$0xff] %vm591, %v545
  %596 = vst.msk [vmem:[%s3 + $0x20] sm:$0xff] %vm591, %v546
  %597 = vst.msk [vmem:[%s3 + $0x28] sm:$0xff] %vm591, %v547
  %598 = vst.msk [vmem:[%s3 + $0x30] sm:$0xff] %vm591, %v548
  %599 = vst.msk [vmem:[%s3 + $0x38] sm:$0xff] %vm591, %v549
  %600 = vst.msk [vmem:[%s3 + $0x40] sm:$0xff] %vm591, %v550
  %601 = vst.msk [vmem:[%s3 + $0x48] sm:$0xff] %vm591, %v551
  %602 = vst.msk [vmem:[%s3 + $0x50] sm:$0xff] %vm591, %v552
  %603 = vst.msk [vmem:[%s3 + $0x58] sm:$0xff] %vm591, %v553
  %604 = vst.msk [vmem:[%s3 + $0x60] sm:$0xff] %vm591, %v554
  %605 = vst.msk [vmem:[%s3 + $0x68] sm:$0xff] %vm591, %v555
  %606 = vst.msk [vmem:[%s3 + $0x70] sm:$0xff] %vm591, %v556
  %607 = vst.msk [vmem:[%s3 + $0x78] sm:$0xff] %vm591, %v557
  %608 = vst.msk [vmem:[%s3 + $0x80] sm:$0xff] %vm591, %v558
  %609 = vst.msk [vmem:[%s3 + $0x88] sm:$0xff] %vm591, %v559
  %610 = vst.msk [vmem:[%s3 + $0x90] sm:$0xff] %vm591, %v560
  %611 = vst.msk [vmem:[%s3 + $0x98] sm:$0xff] %vm591, %v561
  %612 = vst.msk [vmem:[%s3 + $0xa0] sm:$0xff] %vm591, %v562
  %613 = vst.msk [vmem:[%s3 + $0xa8] sm:$0xff] %vm591, %v563
  %614 = vst.msk [vmem:[%s3 + $0xb0] sm:$0xff] %vm591, %v564
  %615 = vst.msk [vmem:[%s3 + $0xb8] sm:$0xff] %vm591, %v565
  %616 = vst.msk [vmem:[%s3 + $0xc0] sm:$0xff] %vm591, %v566
  %617 = vst.msk [vmem:[%s3 + $0xc8] sm:$0xff] %vm591, %v567
  %618 = vst.msk [vmem:[%s3 + $0xd0] sm:$0xff] %vm591, %v568
  %619 = vst.msk [vmem:[%s3 + $0xd8] sm:$0xff] %vm591, %v569
  %620 = vst.msk [vmem:[%s3 + $0xe0] sm:$0xff] %vm591, %v570
  %621 = vst.msk [vmem:[%s3 + $0xe8] sm:$0xff] %vm591, %v571
  %622 = vst.msk [vmem:[%s3 + $0xf0] sm:$0xff] %vm591, %v572
  %623 = vst.msk [vmem:[%s3 + $0xf8] sm:$0xff] %vm591, %v573
  %624 = vst.msk [vmem:[%s3 + $0x100] sm:$0xff] %vm591, %v574
  %625 = vst.msk [vmem:[%s3 + $0x108] sm:$0xff] %vm591, %v575
  %626 = vst.msk [vmem:[%s3 + $0x110] sm:$0xff] %vm591, %v576
  %627 = vst.msk [vmem:[%s3 + $0x118] sm:$0xff] %vm591, %v577
  %628 = vst.msk [vmem:[%s3 + $0x120] sm:$0xff] %vm591, %v578
  %629 = vst.msk [vmem:[%s3 + $0x128] sm:$0xff] %vm591, %v579
  %630 = vst.msk [vmem:[%s3 + $0x130] sm:$0xff] %vm591, %v580
  %631 = vst.msk [vmem:[%s3 + $0x138] sm:$0xff] %vm591, %v581
  %632 = vst.msk [vmem:[%s3 + $0x140] sm:$0xff] %vm591, %v582
  %633 = vst.msk [vmem:[%s3 + $0x148] sm:$0xff] %vm591, %v583
  %634 = vst.msk [vmem:[%s3 + $0x150] sm:$0xff] %vm591, %v584
  %635 = vst.msk [vmem:[%s3 + $0x158] sm:$0xff] %vm591, %v585
  %636 = vst.msk [vmem:[%s3 + $0x160] sm:$0xff] %vm591, %v586
  %637 = vst.msk [vmem:[%s3 + $0x168] sm:$0xff] %vm591, %v587
  %638 = vst.msk [vmem:[%s3 + $0x170] sm:$0xff] %vm591, %v588
  %639 = vst.msk [vmem:[%s3 + $0x178] sm:$0xff] %vm591, %v589
  %640 = vst.msk [vmem:[%s3 + $0x180] sm:$0xff] %vm591, %v590
  // Predicated region
  $region14: #{dqn_forward_pallas.3} parent=0 // pred_check
    _
  $region15: #{dqn_forward_pallas.3} parent=0 // pred_check_branch
    %642 = sbr.rel (0) target = $region17
  $region16: #{dqn_forward_pallas.3} parent=0 // pred_region
    _
  $region17: #{dqn_forward_pallas.3} parent=0 // pred_fallthru
    _
  // Predicated region
  $region18: #{dqn_forward_pallas.3} parent=0 // pred_check
    _
  $region19: #{dqn_forward_pallas.3} parent=0 // pred_check_branch
    %644 = sbr.rel (0) target = $region21
  $region20: #{dqn_forward_pallas.3} parent=0 // pred_region
    _
  $region21: #{dqn_forward_pallas.3} parent=0 // pred_fallthru
    _

// kernel: dqn_forward_pallas.4
$region0: #{dqn_forward_pallas.4}
  #allocation0 [shape = 'u32[]', space=smem, size = 0x4, offset = 0x4, fixed_abs, tag = 'smem constant byte address 0x4 - core index']
  #allocation1 [shape = 'u32[144,128]{1,0:T(1,128)}', space=vmem, size = 0x12000, scoped, tag = 'internal scratch']
  %s0 = inlined_call_operand.vmem [shape: f32[50,400], index: 0, kind: input, shape index: {}]
  %s1 = inlined_call_operand.vmem [shape: f32[400,32], index: 1, kind: input, shape index: {}]
  %s2 = inlined_call_operand.vmem [shape: f32[1,32], index: 2, kind: input, shape index: {}]
  %s3 = inlined_call_operand.vmem [shape: f32[50,32], index: 3, kind: output, shape index: {}]
  %s4 = sld [smem:[#allocation0]]
  $region22: #{dqn_forward_pallas.4} parent=0
    _
  %s6 = ssub.s32 1, %s4
  %s7 = scalar_select 0, %s6, %s4
  // Predicated region
  $region2: #{dqn_forward_pallas.4} parent=0 // pred_check
    _
  $region3: #{dqn_forward_pallas.4} parent=0 // pred_check_branch
    %9 = sbr.rel (0) target = $region5
  $region4: #{dqn_forward_pallas.4} parent=0 // pred_region
    _
  $region5: #{dqn_forward_pallas.4} parent=0 // pred_fallthru
    _
  // Predicated region
  $region6: #{dqn_forward_pallas.4} parent=0 // pred_check
    _
  $region7: #{dqn_forward_pallas.4} parent=0 // pred_check_branch
    %11 = sbr.rel (0) target = $region9
  $region8: #{dqn_forward_pallas.4} parent=0 // pred_region
    _
  $region9: #{dqn_forward_pallas.4} parent=0 // pred_fallthru
    _
  // Predicated region
  $region10: #{dqn_forward_pallas.4} parent=0 // pred_check
    _
  $region11: #{dqn_forward_pallas.4} parent=0 // pred_check_branch
    %13 = sbr.rel (0) target = $region13
  $region12: #{dqn_forward_pallas.4} parent=0 // pred_region
    _
  $region13: #{dqn_forward_pallas.4} parent=0 // pred_fallthru
    _
  %v14 = vld [vmem:[%s0] sm:$0xff]
  %v15 = vld [vmem:[%s0 + $0x8] sm:$0xff]
  %v16 = vld [vmem:[%s0 + $0x10] sm:$0xff]
  %v17 = vld [vmem:[%s0 + $0x18] sm:$0xff]
  %v18 = vld [vmem:[%s0 + $0x20] sm:$0xff]
  %v19 = vld [vmem:[%s0 + $0x28] sm:$0xff]
  %v20 = vld [vmem:[%s0 + $0x30] sm:$0xff]
  %v21 = vld [vmem:[%s0 + $0x38] sm:$0xff]
  %v22 = vld [vmem:[%s0 + $0x40] sm:$0xff]
  %v23 = vld [vmem:[%s0 + $0x48] sm:$0xff]
  %v24 = vld [vmem:[%s0 + $0x50] sm:$0xff]
  %v25 = vld [vmem:[%s0 + $0x58] sm:$0xff]
  %v26 = vld [vmem:[%s0 + $0x60] sm:$0xff]
  %v27 = vld [vmem:[%s0 + $0x68] sm:$0xff]
  %v28 = vld [vmem:[%s0 + $0x70] sm:$0xff]
  %v29 = vld [vmem:[%s0 + $0x78] sm:$0xff]
  %v30 = vld [vmem:[%s0 + $0x80] sm:$0xff]
  %v31 = vld [vmem:[%s0 + $0x88] sm:$0xff]
  %v32 = vld [vmem:[%s0 + $0x90] sm:$0xff]
  %v33 = vld [vmem:[%s0 + $0x98] sm:$0xff]
  %v34 = vld [vmem:[%s0 + $0xa0] sm:$0xff]
  %v35 = vld [vmem:[%s0 + $0xa8] sm:$0xff]
  %v36 = vld [vmem:[%s0 + $0xb0] sm:$0xff]
  %v37 = vld [vmem:[%s0 + $0xb8] sm:$0xff]
  %v38 = vld [vmem:[%s0 + $0xc0] sm:$0x3]
  %v39 = vld [vmem:[%s0 + $0xc8] sm:$0x3]
  %v40 = vld [vmem:[%s0 + $0xd0] sm:$0x3]
  %v41 = vld [vmem:[%s0 + $0xd8] sm:$0x3]
  %v42 = vld [vmem:[%s1] sm:$0xff]
  %v43 = vld [vmem:[%s1 + $0x8] sm:$0xff]
  %v44 = vld [vmem:[%s1 + $0x10] sm:$0xff]
  %v45 = vld [vmem:[%s1 + $0x18] sm:$0xff]
  %v46 = vld [vmem:[%s1 + $0x20] sm:$0xff]
  %v47 = vld [vmem:[%s1 + $0x28] sm:$0xff]
  %v48 = vld [vmem:[%s1 + $0x30] sm:$0xff]
  %v49 = vld [vmem:[%s1 + $0x38] sm:$0xff]
  %v50 = vld [vmem:[%s1 + $0x40] sm:$0xff]
  %v51 = vld [vmem:[%s1 + $0x48] sm:$0xff]
  %v52 = vld [vmem:[%s1 + $0x50] sm:$0xff]
  %v53 = vld [vmem:[%s1 + $0x58] sm:$0xff]
  %v54 = vld [vmem:[%s1 + $0x60] sm:$0xff]
  %v55 = vld [vmem:[%s1 + $0x68] sm:$0xff]
  %v56 = vld [vmem:[%s1 + $0x70] sm:$0xff]
  %v57 = vld [vmem:[%s1 + $0x78] sm:$0xff]
  %v58 = vld [vmem:[%s1 + $0x80] sm:$0xff]
  %v59 = vld [vmem:[%s1 + $0x88] sm:$0xff]
  %v60 = vld [vmem:[%s1 + $0x90] sm:$0xff]
  %v61 = vld [vmem:[%s1 + $0x98] sm:$0xff]
  %v62 = vld [vmem:[%s1 + $0xa0] sm:$0xff]
  %v63 = vld [vmem:[%s1 + $0xa8] sm:$0xff]
  %v64 = vld [vmem:[%s1 + $0xb0] sm:$0xff]
  %v65 = vld [vmem:[%s1 + $0xb8] sm:$0xff]
  %v66 = vld [vmem:[%s1 + $0xc0] sm:$0xff]
  %v67 = vld [vmem:[%s1 + $0xc8] sm:$0xff]
  %v68 = vld [vmem:[%s1 + $0xd0] sm:$0xff]
  %v69 = vld [vmem:[%s1 + $0xd8] sm:$0xff]
  %v70 = vld [vmem:[%s1 + $0xe0] sm:$0xff]
  %v71 = vld [vmem:[%s1 + $0xe8] sm:$0xff]
  %v72 = vld [vmem:[%s1 + $0xf0] sm:$0xff]
  %v73 = vld [vmem:[%s1 + $0xf8] sm:$0xff]
  %v74 = vld [vmem:[%s1 + $0x100] sm:$0xff]
  %v75 = vld [vmem:[%s1 + $0x108] sm:$0xff]
  %v76 = vld [vmem:[%s1 + $0x110] sm:$0xff]
  %v77 = vld [vmem:[%s1 + $0x118] sm:$0xff]
  %v78 = vld [vmem:[%s1 + $0x120] sm:$0xff]
  %v79 = vld [vmem:[%s1 + $0x128] sm:$0xff]
  %v80 = vld [vmem:[%s1 + $0x130] sm:$0xff]
  %v81 = vld [vmem:[%s1 + $0x138] sm:$0xff]
  %v82 = vld [vmem:[%s1 + $0x140] sm:$0xff]
  %v83 = vld [vmem:[%s1 + $0x148] sm:$0xff]
  %v84 = vld [vmem:[%s1 + $0x150] sm:$0xff]
  %v85 = vld [vmem:[%s1 + $0x158] sm:$0xff]
  %v86 = vld [vmem:[%s1 + $0x160] sm:$0xff]
  %v87 = vld [vmem:[%s1 + $0x168] sm:$0xff]
  %v88 = vld [vmem:[%s1 + $0x170] sm:$0xff]
  %v89 = vld [vmem:[%s1 + $0x178] sm:$0xff]
  %v90 = vld [vmem:[%s1 + $0x180] sm:$0xff]
  %v91 = vld [vmem:[%s1 + $0x188] sm:$0xff]
  %v92 = vld [vmem:[%s2] sm:$0x1]
  %v94 = vlaneseq
  %v95 = vshrl.u32 %v94, 7
  %v96 = vsub.s32 0, %v95
  %v97 = vrot.slane %v92, %v96
  %vm99 = vcmask 130048
  %v101 = vsel %vm99, %v17, 0
  %v104 = vsel %vm99, %v21, 0
  %v107 = vsel %vm99, %v25, 0
  %v110 = vsel %vm99, %v29, 0
  %v113 = vsel %vm99, %v33, 0
  %v116 = vsel %vm99, %v37, 0
  %v119 = vsel %vm99, %v41, 0
  %121 = vmatprep.subr.mxu0 0.0
  %122 = vmatpush1.msra.mxu0 %v42
  %123 = vmatprep.subr.mxu0 0.0
  %124 = vmatpush1.msra.mxu0 %v43
  %125 = vmatprep.subr.mxu0 0.0
  %126 = vmatpush1.msra.mxu0 %v44
  %127 = vmatprep.subr.mxu0 0.0
  %128 = vmatpush1.msra.mxu0 %v45
  %129 = vmatprep.subr.mxu0 0.0
  %130 = vmatpush1.msra.mxu0 %v46
  %131 = vmatprep.subr.mxu0 0.0
  %132 = vmatpush1.msra.mxu0 %v47
  %133 = vmatprep.subr.mxu0 0.0
  %134 = vmatpush1.msra.mxu0 %v48
  %135 = vmatprep.subr.mxu0 0.0
  %136 = vmatpush1.msra.mxu0 %v49
  %137 = vmatprep.subr.mxu0 0.0
  %138 = vmatpush1.msra.mxu0 %v50
  %139 = vmatprep.subr.mxu0 0.0
  %140 = vmatpush1.msra.mxu0 %v51
  %141 = vmatprep.subr.mxu0 0.0
  %142 = vmatpush1.msra.mxu0 %v52
  %143 = vmatprep.subr.mxu0 0.0
  %144 = vmatpush1.msra.mxu0 %v53
  %145 = vmatprep.subr.mxu0 0.0
  %146 = vmatpush1.msra.mxu0 %v54
  %147 = vmatprep.subr.mxu0 0.0
  %148 = vmatpush1.msra.mxu0 %v55
  %149 = vmatprep.subr.mxu0 0.0
  %150 = vmatpush1.msra.mxu0 %v56
  %151 = vmatprep.subr.mxu0 0.0
  %152 = vmatpush1.msra.mxu0 %v57
  %153 = vmatprep.subr.mxu0 0.0
  %154 = vmatpush1.msra.mxu0 %v58
  %155 = vmatprep.subr.mxu0 0.0
  %156 = vmatpush1.msra.mxu0 %v59
  %157 = vmatprep.subr.mxu0 0.0
  %158 = vmatpush1.msra.mxu0 %v60
  %159 = vmatprep.subr.mxu0 0.0
  %160 = vmatpush1.msra.mxu0 %v61
  %161 = vmatprep.subr.mxu0 0.0
  %162 = vmatpush1.msra.mxu0 %v62
  %163 = vmatprep.subr.mxu0 0.0
  %164 = vmatpush1.msra.mxu0 %v63
  %165 = vmatprep.subr.mxu0 0.0
  %166 = vmatpush1.msra.mxu0 %v64
  %167 = vmatprep.subr.mxu0 0.0
  %168 = vmatpush1.msra.mxu0 %v65
  %169 = vmatprep.subr.mxu0 0.0
  %170 = vmatpush1.msra.mxu0 %v66
  %171 = vmatprep.subr.mxu0 0.0
  %172 = vmatpush1.msra.mxu0 %v67
  %173 = vmatprep.subr.mxu0 0.0
  %174 = vmatpush1.msra.mxu0 %v68
  %175 = vmatprep.subr.mxu0 0.0
  %176 = vmatpush1.msra.mxu0 %v69
  %177 = vmatprep.subr.mxu0 0.0
  %178 = vmatpush1.msra.mxu0 %v70
  %179 = vmatprep.subr.mxu0 0.0
  %180 = vmatpush1.msra.mxu0 %v71
  %181 = vmatprep.subr.mxu0 0.0
  %182 = vmatpush1.msra.mxu0 %v72
  %183 = vmatprep.subr.mxu0 0.0
  %184 = vmatpush1.msra.mxu0 %v73
  %185 = vmatprep.mubr.f32.mxu0 %v15
  %186 = vmatmul.mubr.f32.gmra.mrb[0].mxu0 %v14
  %v187 = vpop.f32.mrb[0].mxu0
  %v188 = vadd.f32 %v97, %v187
  %v189 = vpop.f32.mrb[0].mxu0
  %190 = vmatprep.mubr.f32.mxu0 %v19
  %191 = vmatmul.mubr.f32.gmra.mrb[0].mxu0 %v18
  %v192 = vpop.f32.mrb[0].mxu0
  %v193 = vadd.f32 %v97, %v192
  %v194 = vpop.f32.mrb[0].mxu0
  %195 = vmatprep.mubr.f32.mxu0 %v23
  %196 = vmatmul.mubr.f32.gmra.mrb[0].mxu0 %v22
  %v197 = vpop.f32.mrb[0].mxu0
  %v198 = vadd.f32 %v97, %v197
  %v199 = vpop.f32.mrb[0].mxu0
  %200 = vmatprep.mubr.f32.mxu0 %v27
  %201 = vmatmul.mubr.f32.gmra.mrb[0].mxu0 %v26
  %v202 = vpop.f32.mrb[0].mxu0
  %v203 = vadd.f32 %v97, %v202
  %v204 = vpop.f32.mrb[0].mxu0
  %205 = vmatprep.mubr.f32.mxu0 %v31
  %206 = vmatmul.mubr.f32.gmra.mrb[0].mxu0 %v30
  %v207 = vpop.f32.mrb[0].mxu0
  %v208 = vadd.f32 %v97, %v207
  %v209 = vpop.f32.mrb[0].mxu0
  %210 = vmatprep.mubr.f32.mxu0 %v35
  %211 = vmatmul.mubr.f32.gmra.mrb[0].mxu0 %v34
  %v212 = vpop.f32.mrb[0].mxu0
  %v213 = vadd.f32 %v97, %v212
  %v214 = vpop.f32.mrb[0].mxu0
  %215 = vmatprep.mubr.f32.mxu0 %v39
  %216 = vmatmul.mubr.f32.gmra.mrb[0].mxu0 %v38
  %v217 = vpop.f32.mrb[0].mxu0
  %v218 = vadd.f32 %v97, %v217
  %v219 = vpop.f32.mrb[0].mxu0
  %220 = vdwg.mxu0
  %221 = vmatprep.subr.mxu0 0.0
  %222 = vmatpush1.msra.mxu0 %v74
  %223 = vmatprep.subr.mxu0 0.0
  %224 = vmatpush1.msra.mxu0 %v75
  %225 = vmatprep.subr.mxu0 0.0
  %226 = vmatpush1.msra.mxu0 %v76
  %227 = vmatprep.subr.mxu0 0.0
  %228 = vmatpush1.msra.mxu0 %v77
  %229 = vmatprep.subr.mxu0 0.0
  %230 = vmatpush1.msra.mxu0 %v78
  %231 = vmatprep.subr.mxu0 0.0
  %232 = vmatpush1.msra.mxu0 %v79
  %233 = vmatprep.subr.mxu0 0.0
  %234 = vmatpush1.msra.mxu0 %v80
  %235 = vmatprep.subr.mxu0 0.0
  %236 = vmatpush1.msra.mxu0 %v81
  %237 = vmatprep.subr.mxu0 0.0
  %238 = vmatpush1.msra.mxu0 %v82
  %239 = vmatprep.subr.mxu0 0.0
  %240 = vmatpush1.msra.mxu0 %v83
  %241 = vmatprep.subr.mxu0 0.0
  %242 = vmatpush1.msra.mxu0 %v84
  %243 = vmatprep.subr.mxu0 0.0
  %244 = vmatpush1.msra.mxu0 %v85
  %245 = vmatprep.subr.mxu0 0.0
  %246 = vmatpush1.msra.mxu0 %v86
  %247 = vmatprep.subr.mxu0 0.0
  %248 = vmatpush1.msra.mxu0 %v87
  %249 = vmatprep.subr.mxu0 0.0
  %250 = vmatpush1.msra.mxu0 %v88
  %251 = vmatprep.subr.mxu0 0.0
  %252 = vmatpush1.msra.mxu0 %v89
  %253 = vmatprep.subr.mxu0 0.0
  %254 = vmatpush1.msra.mxu0 %v90
  %255 = vmatprep.subr.mxu0 0.0
  %256 = vmatpush1.msra.mxu0 %v91
  %257 = vmatprep.subr.mxu0 0.0
  %258 = vmatpush1.msra.mxu0 0.0
  %259 = vmatprep.subr.mxu0 0.0
  %260 = vmatpush1.msra.mxu0 0.0
  %261 = vmatprep.subr.mxu0 0.0
  %262 = vmatpush1.msra.mxu0 0.0
  %263 = vmatprep.subr.mxu0 0.0
  %264 = vmatpush1.msra.mxu0 0.0
  %265 = vmatprep.subr.mxu0 0.0
  %266 = vmatpush1.msra.mxu0 0.0
  %267 = vmatprep.subr.mxu0 0.0
  %268 = vmatpush1.msra.mxu0 0.0
  %269 = vmatprep.subr.mxu0 0.0
  %270 = vmatpush1.msra.mxu0 0.0
  %271 = vmatprep.subr.mxu0 0.0
  %272 = vmatpush1.msra.mxu0 0.0
  %273 = vmatprep.subr.mxu0 0.0
  %274 = vmatpush1.msra.mxu0 0.0
  %275 = vmatprep.subr.mxu0 0.0
  %276 = vmatpush1.msra.mxu0 0.0
  %277 = vmatprep.subr.mxu0 0.0
  %278 = vmatpush1.msra.mxu0 0.0
  %279 = vmatprep.subr.mxu0 0.0
  %280 = vmatpush1.msra.mxu0 0.0
  %281 = vmatprep.subr.mxu0 0.0
  %282 = vmatpush1.msra.mxu0 0.0
  %283 = vmatprep.subr.mxu0 0.0
  %284 = vmatpush1.msra.mxu0 0.0
  %285 = vmatprep.mubr.f32.mxu0 %v101
  %286 = vmatmul.mubr.f32.gmra.mrb[0].mxu0 %v16
  %v287 = vpop.f32.mrb[0].mxu0
  %v288 = vadd.f32 %v188, %v287
  %v289 = vpop.f32.mrb[0].mxu0
  %290 = vmatprep.mubr.f32.mxu0 %v104
  %291 = vmatmul.mubr.f32.gmra.mrb[0].mxu0 %v20
  %v292 = vpop.f32.mrb[0].mxu0
  %v293 = vadd.f32 %v193, %v292
  %v294 = vpop.f32.mrb[0].mxu0
  %295 = vmatprep.mubr.f32.mxu0 %v107
  %296 = vmatmul.mubr.f32.gmra.mrb[0].mxu0 %v24
  %v297 = vpop.f32.mrb[0].mxu0
  %v298 = vadd.f32 %v198, %v297
  %v299 = vpop.f32.mrb[0].mxu0
  %300 = vmatprep.mubr.f32.mxu0 %v110
  %301 = vmatmul.mubr.f32.gmra.mrb[0].mxu0 %v28
  %v302 = vpop.f32.mrb[0].mxu0
  %v303 = vadd.f32 %v203, %v302
  %v304 = vpop.f32.mrb[0].mxu0
  %305 = vmatprep.mubr.f32.mxu0 %v113
  %306 = vmatmul.mubr.f32.gmra.mrb[0].mxu0 %v32
  %v307 = vpop.f32.mrb[0].mxu0
  %v308 = vadd.f32 %v208, %v307
  %v309 = vpop.f32.mrb[0].mxu0
  %310 = vmatprep.mubr.f32.mxu0 %v116
  %311 = vmatmul.mubr.f32.gmra.mrb[0].mxu0 %v36
  %v312 = vpop.f32.mrb[0].mxu0
  %v313 = vadd.f32 %v213, %v312
  %v314 = vpop.f32.mrb[0].mxu0
  %315 = vmatprep.mubr.f32.mxu0 %v119
  %316 = vmatmul.mubr.f32.gmra.mrb[0].mxu0 %v40
  %v317 = vpop.f32.mrb[0].mxu0
  %v318 = vadd.f32 %v218, %v317
  %v319 = vpop.f32.mrb[0].mxu0
  %320 = vdwg.mxu0
  %v321 = vmax.f32 %v288, 0.0
  %v322 = vmax.f32 %v293, 0.0
  %v323 = vmax.f32 %v298, 0.0
  %v324 = vmax.f32 %v303, 0.0
  %v325 = vmax.f32 %v308, 0.0
  %v326 = vmax.f32 %v313, 0.0
  %v327 = vmax.f32 %v318, 0.0
  %vm328 = vcmask 261120
  %329 = vst.msk [vmem:[%s3] sm:$0xff] %vm328, %v321
  %330 = vst.msk [vmem:[%s3 + $0x8] sm:$0xff] %vm328, %v322
  %331 = vst.msk [vmem:[%s3 + $0x10] sm:$0xff] %vm328, %v323
  %332 = vst.msk [vmem:[%s3 + $0x18] sm:$0xff] %vm328, %v324
  %333 = vst.msk [vmem:[%s3 + $0x20] sm:$0xff] %vm328, %v325
  %334 = vst.msk [vmem:[%s3 + $0x28] sm:$0xff] %vm328, %v326
  %vm335 = vcmask 254976
  %336 = vst.msk [vmem:[%s3 + $0x30] sm:$0x3] %vm335, %v327
  // Predicated region
  $region14: #{dqn_forward_pallas.4} parent=0 // pred_check
    _
  $region15: #{dqn_forward_pallas.4} parent=0 // pred_check_branch
    %338 = sbr.rel (0) target = $region17
  $region16: #{dqn_forward_pallas.4} parent=0 // pred_region
    _
  $region17: #{dqn_forward_pallas.4} parent=0 // pred_fallthru
    _
  // Predicated region
  $region18: #{dqn_forward_pallas.4} parent=0 // pred_check
    _
  $region19: #{dqn_forward_pallas.4} parent=0 // pred_check_branch
    %340 = sbr.rel (0) target = $region21
  $region20: #{dqn_forward_pallas.4} parent=0 // pred_region
    _
  $region21: #{dqn_forward_pallas.4} parent=0 // pred_fallthru
    _

// kernel: dqn_forward_pallas.5
$region0: #{dqn_forward_pallas.5}
  #allocation0 [shape = 'u32[]', space=smem, size = 0x4, offset = 0x4, fixed_abs, tag = 'smem constant byte address 0x4 - core index']
  #allocation1 [shape = 'u32[144,128]{1,0:T(1,128)}', space=vmem, size = 0x12000, scoped, tag = 'internal scratch']
  %s0 = inlined_call_operand.vmem [shape: f32[2,800], index: 0, kind: input, shape index: {}]
  %s1 = inlined_call_operand.vmem [shape: f32[800,32], index: 1, kind: input, shape index: {}]
  %s2 = inlined_call_operand.vmem [shape: f32[1,32], index: 2, kind: input, shape index: {}]
  %s3 = inlined_call_operand.vmem [shape: f32[32,2], index: 3, kind: input, shape index: {}]
  %s4 = inlined_call_operand.vmem [shape: f32[1,2], index: 4, kind: input, shape index: {}]
  %s5 = inlined_call_operand.hbm [shape: f32[2,2], index: 5, kind: output, shape index: {}]
  %s6 = sld [smem:[#allocation0]]
  $region30: #{dqn_forward_pallas.5} parent=0
    _
  %s8 = ssub.s32 1, %s6
  %s9 = scalar_select 0, %s8, %s6
  $region1: #{dqn_forward_pallas.5} parent=0
    #allocation2 [shape = 'u8[1024]{0}', space=vmem, size = 0x400, scoped, tag = 'output window, operand 0, single buffered']
    #allocation3 [shape = 's32[1]{0}', space=sflag, size = 0x4, scoped, tag = 'scoped memory for dqn_forward_pallas.5']
    %10 = vsyncpa [#allocation3], 0
    // Predicated region
    $region2: #{dqn_forward_pallas.5} parent=1 // pred_check
      _
    $region3: #{dqn_forward_pallas.5} parent=1 // pred_check_branch
      %12 = sbr.rel (0) target = $region5
    $region4: #{dqn_forward_pallas.5} parent=1 // pred_region
      _
    $region5: #{dqn_forward_pallas.5} parent=1 // pred_fallthru
      _
    // Predicated region
    $region6: #{dqn_forward_pallas.5} parent=1 // pred_check
      _
    $region7: #{dqn_forward_pallas.5} parent=1 // pred_check_branch
      %14 = sbr.rel (0) target = $region9
    $region8: #{dqn_forward_pallas.5} parent=1 // pred_region
      _
    $region9: #{dqn_forward_pallas.5} parent=1 // pred_fallthru
      _
    // Predicated region
    $region10: #{dqn_forward_pallas.5} parent=1 // pred_check
      _
    $region11: #{dqn_forward_pallas.5} parent=1 // pred_check_branch
      %16 = sbr.rel (0) target = $region13
    $region12: #{dqn_forward_pallas.5} parent=1 // pred_region
      _
    $region13: #{dqn_forward_pallas.5} parent=1 // pred_fallthru
      _
    // Predicated region
    $region14: #{dqn_forward_pallas.5} parent=1 // pred_check
      _
    $region15: #{dqn_forward_pallas.5} parent=1 // pred_check_branch
      %18 = sbr.rel (0) target = $region17
    $region16: #{dqn_forward_pallas.5} parent=1 // pred_region
      _
    $region17: #{dqn_forward_pallas.5} parent=1 // pred_fallthru
      _
    // Predicated region
    $region18: #{dqn_forward_pallas.5} parent=1 // pred_check
      _
    $region19: #{dqn_forward_pallas.5} parent=1 // pred_check_branch
      %20 = sbr.rel (0) target = $region21
    $region20: #{dqn_forward_pallas.5} parent=1 // pred_region
      _
    $region21: #{dqn_forward_pallas.5} parent=1 // pred_fallthru
      _
    %v21 = vld [vmem:[%s0] sm:$0xff]
    %v22 = vld [vmem:[%s0 + $0x8] sm:$0x3f]
    %v23 = vld [vmem:[%s1] sm:$0xff]
    %v24 = vld [vmem:[%s1 + $0x8] sm:$0xff]
    %v25 = vld [vmem:[%s1 + $0x10] sm:$0xff]
    %v26 = vld [vmem:[%s1 + $0x18] sm:$0xff]
    %v27 = vld [vmem:[%s1 + $0x20] sm:$0xff]
    %v28 = vld [vmem:[%s1 + $0x28] sm:$0xff]
    %v29 = vld [vmem:[%s1 + $0x30] sm:$0xff]
    %v30 = vld [vmem:[%s1 + $0x38] sm:$0xff]
    %v31 = vld [vmem:[%s1 + $0x40] sm:$0xff]
    %v32 = vld [vmem:[%s1 + $0x48] sm:$0xff]
    %v33 = vld [vmem:[%s1 + $0x50] sm:$0xff]
    %v34 = vld [vmem:[%s1 + $0x58] sm:$0xff]
    %v35 = vld [vmem:[%s1 + $0x60] sm:$0xff]
    %v36 = vld [vmem:[%s1 + $0x68] sm:$0xff]
    %v37 = vld [vmem:[%s1 + $0x70] sm:$0xff]
    %v38 = vld [vmem:[%s1 + $0x78] sm:$0xff]
    %v39 = vld [vmem:[%s1 + $0x80] sm:$0xff]
    %v40 = vld [vmem:[%s1 + $0x88] sm:$0xff]
    %v41 = vld [vmem:[%s1 + $0x90] sm:$0xff]
    %v42 = vld [vmem:[%s1 + $0x98] sm:$0xff]
    %v43 = vld [vmem:[%s1 + $0xa0] sm:$0xff]
    %v44 = vld [vmem:[%s1 + $0xa8] sm:$0xff]
    %v45 = vld [vmem:[%s1 + $0xb0] sm:$0xff]
    %v46 = vld [vmem:[%s1 + $0xb8] sm:$0xff]
    %v47 = vld [vmem:[%s1 + $0xc0] sm:$0xff]
    %v48 = vld [vmem:[%s1 + $0xc8] sm:$0xff]
    %v49 = vld [vmem:[%s1 + $0xd0] sm:$0xff]
    %v50 = vld [vmem:[%s1 + $0xd8] sm:$0xff]
    %v51 = vld [vmem:[%s1 + $0xe0] sm:$0xff]
    %v52 = vld [vmem:[%s1 + $0xe8] sm:$0xff]
    %v53 = vld [vmem:[%s1 + $0xf0] sm:$0xff]
    %v54 = vld [vmem:[%s1 + $0xf8] sm:$0xff]
    %v55 = vld [vmem:[%s1 + $0x100] sm:$0xff]
    %v56 = vld [vmem:[%s1 + $0x108] sm:$0xff]
    %v57 = vld [vmem:[%s1 + $0x110] sm:$0xff]
    %v58 = vld [vmem:[%s1 + $0x118] sm:$0xff]
    %v59 = vld [vmem:[%s1 + $0x120] sm:$0xff]
    %v60 = vld [vmem:[%s1 + $0x128] sm:$0xff]
    %v61 = vld [vmem:[%s1 + $0x130] sm:$0xff]
    %v62 = vld [vmem:[%s1 + $0x138] sm:$0xff]
    %v63 = vld [vmem:[%s1 + $0x140] sm:$0xff]
    %v64 = vld [vmem:[%s1 + $0x148] sm:$0xff]
    %v65 = vld [vmem:[%s1 + $0x150] sm:$0xff]
    %v66 = vld [vmem:[%s1 + $0x158] sm:$0xff]
    %v67 = vld [vmem:[%s1 + $0x160] sm:$0xff]
    %v68 = vld [vmem:[%s1 + $0x168] sm:$0xff]
    %v69 = vld [vmem:[%s1 + $0x170] sm:$0xff]
    %v70 = vld [vmem:[%s1 + $0x178] sm:$0xff]
    %v71 = vld [vmem:[%s1 + $0x180] sm:$0xff]
    %v72 = vld [vmem:[%s1 + $0x188] sm:$0xff]
    %v73 = vld [vmem:[%s1 + $0x190] sm:$0xff]
    %v74 = vld [vmem:[%s1 + $0x198] sm:$0xff]
    %v75 = vld [vmem:[%s1 + $0x1a0] sm:$0xff]
    %v76 = vld [vmem:[%s1 + $0x1a8] sm:$0xff]
    %v77 = vld [vmem:[%s1 + $0x1b0] sm:$0xff]
    %v78 = vld [vmem:[%s1 + $0x1b8] sm:$0xff]
    %v79 = vld [vmem:[%s1 + $0x1c0] sm:$0xff]
    %v80 = vld [vmem:[%s1 + $0x1c8] sm:$0xff]
    %v81 = vld [vmem:[%s1 + $0x1d0] sm:$0xff]
    %v82 = vld [vmem:[%s1 + $0x1d8] sm:$0xff]
    %v83 = vld [vmem:[%s1 + $0x1e0] sm:$0xff]
    %v84 = vld [vmem:[%s1 + $0x1e8] sm:$0xff]
    %v85 = vld [vmem:[%s1 + $0x1f0] sm:$0xff]
    %v86 = vld [vmem:[%s1 + $0x1f8] sm:$0xff]
    %v87 = vld [vmem:[%s1 + $0x200] sm:$0xff]
    %v88 = vld [vmem:[%s1 + $0x208] sm:$0xff]
    %v89 = vld [vmem:[%s1 + $0x210] sm:$0xff]
    %v90 = vld [vmem:[%s1 + $0x218] sm:$0xff]
    %v91 = vld [vmem:[%s1 + $0x220] sm:$0xff]
    %v92 = vld [vmem:[%s1 + $0x228] sm:$0xff]
    %v93 = vld [vmem:[%s1 + $0x230] sm:$0xff]
    %v94 = vld [vmem:[%s1 + $0x238] sm:$0xff]
    %v95 = vld [vmem:[%s1 + $0x240] sm:$0xff]
    %v96 = vld [vmem:[%s1 + $0x248] sm:$0xff]
    %v97 = vld [vmem:[%s1 + $0x250] sm:$0xff]
    %v98 = vld [vmem:[%s1 + $0x258] sm:$0xff]
    %v99 = vld [vmem:[%s1 + $0x260] sm:$0xff]
    %v100 = vld [vmem:[%s1 + $0x268] sm:$0xff]
    %v101 = vld [vmem:[%s1 + $0x270] sm:$0xff]
    %v102 = vld [vmem:[%s1 + $0x278] sm:$0xff]
    %v103 = vld [vmem:[%s1 + $0x280] sm:$0xff]
    %v104 = vld [vmem:[%s1 + $0x288] sm:$0xff]
    %v105 = vld [vmem:[%s1 + $0x290] sm:$0xff]
    %v106 = vld [vmem:[%s1 + $0x298] sm:$0xff]
    %v107 = vld [vmem:[%s1 + $0x2a0] sm:$0xff]
    %v108 = vld [vmem:[%s1 + $0x2a8] sm:$0xff]
    %v109 = vld [vmem:[%s1 + $0x2b0] sm:$0xff]
    %v110 = vld [vmem:[%s1 + $0x2b8] sm:$0xff]
    %v111 = vld [vmem:[%s1 + $0x2c0] sm:$0xff]
    %v112 = vld [vmem:[%s1 + $0x2c8] sm:$0xff]
    %v113 = vld [vmem:[%s1 + $0x2d0] sm:$0xff]
    %v114 = vld [vmem:[%s1 + $0x2d8] sm:$0xff]
    %v115 = vld [vmem:[%s1 + $0x2e0] sm:$0xff]
    %v116 = vld [vmem:[%s1 + $0x2e8] sm:$0xff]
    %v117 = vld [vmem:[%s1 + $0x2f0] sm:$0xff]
    %v118 = vld [vmem:[%s1 + $0x2f8] sm:$0xff]
    %v119 = vld [vmem:[%s1 + $0x300] sm:$0xff]
    %v120 = vld [vmem:[%s1 + $0x308] sm:$0xff]
    %v121 = vld [vmem:[%s1 + $0x310] sm:$0xff]
    %v122 = vld [vmem:[%s1 + $0x318] sm:$0xff]
    %v123 = vld [vmem:[%s2] sm:$0x1]
    %v125 = vlaneseq
    %v126 = vshrl.u32 %v125, 7
    %v127 = vsub.s32 0, %v126
    %v128 = vrot.slane %v123, %v127
    %v132 = vcombine.high %v21, %v21
    %v134 = vunpack.c.l.s4 1983009808
    %v135 = vunpack.c.0.s8 %v134
    %v136 = vlaneseq
    %v137 = vshrl.u32 %v136, 7
    %v138 = vsub.s32 %v135, %v137
    %v139 = vrot.slane %v21, %v138
    %v141 = vunpack.c.l.s4 1983009808
    %v142 = vunpack.c.0.s8 %v141
    %v143 = vlaneseq
    %v144 = vshrl.u32 %v143, 7
    %v145 = vsub.s32 %v142, %v144
    %v146 = vrot.slane %v132, %v145
    %v147 = vcombine.high %v139, %v139
    %v148 = vcombine.high %v146, %v146
    %v149 = vcombine.high %v22, %v22
    %v151 = vunpack.c.l.s4 1983009808
    %v152 = vunpack.c.0.s8 %v151
    %v153 = vlaneseq
    %v154 = vshrl.u32 %v153, 7
    %v155 = vsub.s32 %v152, %v154
    %v156 = vrot.slane %v22, %v155
    %v158 = vunpack.c.l.s4 1983009808
    %v159 = vunpack.c.0.s8 %v158
    %v160 = vlaneseq
    %v161 = vshrl.u32 %v160, 7
    %v162 = vsub.s32 %v159, %v161
    %v163 = vrot.slane %v149, %v162
    %v164 = vcombine.high %v156, %v156
    %vm171 = vcmask 261120
    %v172 = vsel %vm171, %v163, 0
    %174 = vmatprep.subr.mxu0 0.0
    %175 = vmatpush1.msra.mxu0 %v23
    %176 = vmatprep.subr.mxu0 0.0
    %177 = vmatpush1.msra.mxu0 %v24
    %178 = vmatprep.subr.mxu0 0.0
    %179 = vmatpush1.msra.mxu0 %v25
    %180 = vmatprep.subr.mxu0 0.0
    %181 = vmatpush1.msra.mxu0 %v26
    %182 = vmatprep.subr.mxu0 0.0
    %183 = vmatpush1.msra.mxu0 %v27
    %184 = vmatprep.subr.mxu0 0.0
    %185 = vmatpush1.msra.mxu0 %v28
    %186 = vmatprep.subr.mxu0 0.0
    %187 = vmatpush1.msra.mxu0 %v29
    %188 = vmatprep.subr.mxu0 0.0
    %189 = vmatpush1.msra.mxu0 %v30
    %190 = vmatprep.subr.mxu0 0.0
    %191 = vmatpush1.msra.mxu0 %v31
    %192 = vmatprep.subr.mxu0 0.0
    %193 = vmatpush1.msra.mxu0 %v32
    %194 = vmatprep.subr.mxu0 0.0
    %195 = vmatpush1.msra.mxu0 %v33
    %196 = vmatprep.subr.mxu0 0.0
    %197 = vmatpush1.msra.mxu0 %v34
    %198 = vmatprep.subr.mxu0 0.0
    %199 = vmatpush1.msra.mxu0 %v35
    %200 = vmatprep.subr.mxu0 0.0
    %201 = vmatpush1.msra.mxu0 %v36
    %202 = vmatprep.subr.mxu0 0.0
    %203 = vmatpush1.msra.mxu0 %v37
    %204 = vmatprep.subr.mxu0 0.0
    %205 = vmatpush1.msra.mxu0 %v38
    %206 = vmatprep.subr.mxu0 0.0
    %207 = vmatpush1.msra.mxu0 %v39
    %208 = vmatprep.subr.mxu0 0.0
    %209 = vmatpush1.msra.mxu0 %v40
    %210 = vmatprep.subr.mxu0 0.0
    %211 = vmatpush1.msra.mxu0 %v41
    %212 = vmatprep.subr.mxu0 0.0
    %213 = vmatpush1.msra.mxu0 %v42
    %214 = vmatprep.subr.mxu0 0.0
    %215 = vmatpush1.msra.mxu0 %v43
    %216 = vmatprep.subr.mxu0 0.0
    %217 = vmatpush1.msra.mxu0 %v44
    %218 = vmatprep.subr.mxu0 0.0
    %219 = vmatpush1.msra.mxu0 %v45
    %220 = vmatprep.subr.mxu0 0.0
    %221 = vmatpush1.msra.mxu0 %v46
    %222 = vmatprep.subr.mxu0 0.0
    %223 = vmatpush1.msra.mxu0 %v47
    %224 = vmatprep.subr.mxu0 0.0
    %225 = vmatpush1.msra.mxu0 %v48
    %226 = vmatprep.subr.mxu0 0.0
    %227 = vmatpush1.msra.mxu0 %v49
    %228 = vmatprep.subr.mxu0 0.0
    %229 = vmatpush1.msra.mxu0 %v50
    %230 = vmatprep.subr.mxu0 0.0
    %231 = vmatpush1.msra.mxu0 %v51
    %232 = vmatprep.subr.mxu0 0.0
    %233 = vmatpush1.msra.mxu0 %v52
    %234 = vmatprep.subr.mxu0 0.0
    %235 = vmatpush1.msra.mxu0 %v53
    %236 = vmatprep.subr.mxu0 0.0
    %237 = vmatpush1.msra.mxu0 %v54
    %238 = vmatprep.mubr.f32.mxu0 %v147
    %239 = vmatmul.mubr.f32.gmra.mrb[0].mxu0 %v139
    %v240 = vpop.f32.mrb[0].mxu0
    %v241 = vadd.f32 %v128, %v240
    %v242 = vpop.f32.mrb[0].mxu0
    %243 = vdwg.mxu0
    %244 = vmatprep.subr.mxu0 0.0
    %245 = vmatpush1.msra.mxu0 %v55
    %246 = vmatprep.subr.mxu0 0.0
    %247 = vmatpush1.msra.mxu0 %v56
    %248 = vmatprep.subr.mxu0 0.0
    %249 = vmatpush1.msra.mxu0 %v57
    %250 = vmatprep.subr.mxu0 0.0
    %251 = vmatpush1.msra.mxu0 %v58
    %252 = vmatprep.subr.mxu0 0.0
    %253 = vmatpush1.msra.mxu0 %v59
    %254 = vmatprep.subr.mxu0 0.0
    %255 = vmatpush1.msra.mxu0 %v60
    %256 = vmatprep.subr.mxu0 0.0
    %257 = vmatpush1.msra.mxu0 %v61
    %258 = vmatprep.subr.mxu0 0.0
    %259 = vmatpush1.msra.mxu0 %v62
    %260 = vmatprep.subr.mxu0 0.0
    %261 = vmatpush1.msra.mxu0 %v63
    %262 = vmatprep.subr.mxu0 0.0
    %263 = vmatpush1.msra.mxu0 %v64
    %264 = vmatprep.subr.mxu0 0.0
    %265 = vmatpush1.msra.mxu0 %v65
    %266 = vmatprep.subr.mxu0 0.0
    %267 = vmatpush1.msra.mxu0 %v66
    %268 = vmatprep.subr.mxu0 0.0
    %269 = vmatpush1.msra.mxu0 %v67
    %270 = vmatprep.subr.mxu0 0.0
    %271 = vmatpush1.msra.mxu0 %v68
    %272 = vmatprep.subr.mxu0 0.0
    %273 = vmatpush1.msra.mxu0 %v69
    %274 = vmatprep.subr.mxu0 0.0
    %275 = vmatpush1.msra.mxu0 %v70
    %276 = vmatprep.subr.mxu0 0.0
    %277 = vmatpush1.msra.mxu0 %v71
    %278 = vmatprep.subr.mxu0 0.0
    %279 = vmatpush1.msra.mxu0 %v72
    %280 = vmatprep.subr.mxu0 0.0
    %281 = vmatpush1.msra.mxu0 %v73
    %282 = vmatprep.subr.mxu0 0.0
    %283 = vmatpush1.msra.mxu0 %v74
    %284 = vmatprep.subr.mxu0 0.0
    %285 = vmatpush1.msra.mxu0 %v75
    %286 = vmatprep.subr.mxu0 0.0
    %287 = vmatpush1.msra.mxu0 %v76
    %288 = vmatprep.subr.mxu0 0.0
    %289 = vmatpush1.msra.mxu0 %v77
    %290 = vmatprep.subr.mxu0 0.0
    %291 = vmatpush1.msra.mxu0 %v78
    %292 = vmatprep.subr.mxu0 0.0
    %293 = vmatpush1.msra.mxu0 %v79
    %294 = vmatprep.subr.mxu0 0.0
    %295 = vmatpush1.msra.mxu0 %v80
    %296 = vmatprep.subr.mxu0 0.0
    %297 = vmatpush1.msra.mxu0 %v81
    %298 = vmatprep.subr.mxu0 0.0
    %299 = vmatpush1.msra.mxu0 %v82
    %300 = vmatprep.subr.mxu0 0.0
    %301 = vmatpush1.msra.mxu0 %v83
    %302 = vmatprep.subr.mxu0 0.0
    %303 = vmatpush1.msra.mxu0 %v84
    %304 = vmatprep.subr.mxu0 0.0
    %305 = vmatpush1.msra.mxu0 %v85
    %306 = vmatprep.subr.mxu0 0.0
    %307 = vmatpush1.msra.mxu0 %v86
    %308 = vmatprep.mubr.f32.mxu0 %v148
    %309 = vmatmul.mubr.f32.gmra.mrb[0].mxu0 %v146
    %v310 = vpop.f32.mrb[0].mxu0
    %v311 = vadd.f32 %v241, %v310
    %v312 = vpop.f32.mrb[0].mxu0
    %313 = vdwg.mxu0
    %314 = vmatprep.subr.mxu0 0.0
    %315 = vmatpush1.msra.mxu0 %v87
    %316 = vmatprep.subr.mxu0 0.0
    %317 = vmatpush1.msra.mxu0 %v88
    %318 = vmatprep.subr.mxu0 0.0
    %319 = vmatpush1.msra.mxu0 %v89
    %320 = vmatprep.subr.mxu0 0.0
    %321 = vmatpush1.msra.mxu0 %v90
    %322 = vmatprep.subr.mxu0 0.0
    %323 = vmatpush1.msra.mxu0 %v91
    %324 = vmatprep.subr.mxu0 0.0
    %325 = vmatpush1.msra.mxu0 %v92
    %326 = vmatprep.subr.mxu0 0.0
    %327 = vmatpush1.msra.mxu0 %v93
    %328 = vmatprep.subr.mxu0 0.0
    %329 = vmatpush1.msra.mxu0 %v94
    %330 = vmatprep.subr.mxu0 0.0
    %331 = vmatpush1.msra.mxu0 %v95
    %332 = vmatprep.subr.mxu0 0.0
    %333 = vmatpush1.msra.mxu0 %v96
    %334 = vmatprep.subr.mxu0 0.0
    %335 = vmatpush1.msra.mxu0 %v97
    %336 = vmatprep.subr.mxu0 0.0
    %337 = vmatpush1.msra.mxu0 %v98
    %338 = vmatprep.subr.mxu0 0.0
    %339 = vmatpush1.msra.mxu0 %v99
    %340 = vmatprep.subr.mxu0 0.0
    %341 = vmatpush1.msra.mxu0 %v100
    %342 = vmatprep.subr.mxu0 0.0
    %343 = vmatpush1.msra.mxu0 %v101
    %344 = vmatprep.subr.mxu0 0.0
    %345 = vmatpush1.msra.mxu0 %v102
    %346 = vmatprep.subr.mxu0 0.0
    %347 = vmatpush1.msra.mxu0 %v103
    %348 = vmatprep.subr.mxu0 0.0
    %349 = vmatpush1.msra.mxu0 %v104
    %350 = vmatprep.subr.mxu0 0.0
    %351 = vmatpush1.msra.mxu0 %v105
    %352 = vmatprep.subr.mxu0 0.0
    %353 = vmatpush1.msra.mxu0 %v106
    %354 = vmatprep.subr.mxu0 0.0
    %355 = vmatpush1.msra.mxu0 %v107
    %356 = vmatprep.subr.mxu0 0.0
    %357 = vmatpush1.msra.mxu0 %v108
    %358 = vmatprep.subr.mxu0 0.0
    %359 = vmatpush1.msra.mxu0 %v109
    %360 = vmatprep.subr.mxu0 0.0
    %361 = vmatpush1.msra.mxu0 %v110
    %362 = vmatprep.subr.mxu0 0.0
    %363 = vmatpush1.msra.mxu0 %v111
    %364 = vmatprep.subr.mxu0 0.0
    %365 = vmatpush1.msra.mxu0 %v112
    %366 = vmatprep.subr.mxu0 0.0
    %367 = vmatpush1.msra.mxu0 %v113
    %368 = vmatprep.subr.mxu0 0.0
    %369 = vmatpush1.msra.mxu0 %v114
    %370 = vmatprep.subr.mxu0 0.0
    %371 = vmatpush1.msra.mxu0 %v115
    %372 = vmatprep.subr.mxu0 0.0
    %373 = vmatpush1.msra.mxu0 %v116
    %374 = vmatprep.subr.mxu0 0.0
    %375 = vmatpush1.msra.mxu0 %v117
    %376 = vmatprep.subr.mxu0 0.0
    %377 = vmatpush1.msra.mxu0 %v118
    %378 = vmatprep.mubr.f32.mxu0 %v164
    %379 = vmatmul.mubr.f32.gmra.mrb[0].mxu0 %v156
    %v380 = vpop.f32.mrb[0].mxu0
    %v381 = vadd.f32 %v311, %v380
    %v382 = vpop.f32.mrb[0].mxu0
    %383 = vdwg.mxu0
    %384 = vmatprep.subr.mxu0 0.0
    %385 = vmatpush1.msra.mxu0 %v119
    %386 = vmatprep.subr.mxu0 0.0
    %387 = vmatpush1.msra.mxu0 %v120
    %388 = vmatprep.subr.mxu0 0.0
    %389 = vmatpush1.msra.mxu0 %v121
    %390 = vmatprep.subr.mxu0 0.0
    %391 = vmatpush1.msra.mxu0 %v122
    %392 = vmatprep.subr.mxu0 0.0
    %393 = vmatpush1.msra.mxu0 0.0
    %394 = vmatprep.subr.mxu0 0.0
    %395 = vmatpush1.msra.mxu0 0.0
    %396 = vmatprep.subr.mxu0 0.0
    %397 = vmatpush1.msra.mxu0 0.0
    %398 = vmatprep.subr.mxu0 0.0
    %399 = vmatpush1.msra.mxu0 0.0
    %400 = vmatprep.subr.mxu0 0.0
    %401 = vmatpush1.msra.mxu0 0.0
    %402 = vmatprep.subr.mxu0 0.0
    %403 = vmatpush1.msra.mxu0 0.0
    %404 = vmatprep.subr.mxu0 0.0
    %405 = vmatpush1.msra.mxu0 0.0
    %406 = vmatprep.subr.mxu0 0.0
    %407 = vmatpush1.msra.mxu0 0.0
    %408 = vmatprep.subr.mxu0 0.0
    %409 = vmatpush1.msra.mxu0 0.0
    %410 = vmatprep.subr.mxu0 0.0
    %411 = vmatpush1.msra.mxu0 0.0
    %412 = vmatprep.subr.mxu0 0.0
    %413 = vmatpush1.msra.mxu0 0.0
    %414 = vmatprep.subr.mxu0 0.0
    %415 = vmatpush1.msra.mxu0 0.0
    %416 = vmatprep.subr.mxu0 0.0
    %417 = vmatpush1.msra.mxu0 0.0
    %418 = vmatprep.subr.mxu0 0.0
    %419 = vmatpush1.msra.mxu0 0.0
    %420 = vmatprep.subr.mxu0 0.0
    %421 = vmatpush1.msra.mxu0 0.0
    %422 = vmatprep.subr.mxu0 0.0
    %423 = vmatpush1.msra.mxu0 0.0
    %424 = vmatprep.subr.mxu0 0.0
    %425 = vmatpush1.msra.mxu0 0.0
    %426 = vmatprep.subr.mxu0 0.0
    %427 = vmatpush1.msra.mxu0 0.0
    %428 = vmatprep.subr.mxu0 0.0
    %429 = vmatpush1.msra.mxu0 0.0
    %430 = vmatprep.subr.mxu0 0.0
    %431 = vmatpush1.msra.mxu0 0.0
    %432 = vmatprep.subr.mxu0 0.0
    %433 = vmatpush1.msra.mxu0 0.0
    %434 = vmatprep.subr.mxu0 0.0
    %435 = vmatpush1.msra.mxu0 0.0
    %436 = vmatprep.subr.mxu0 0.0
    %437 = vmatpush1.msra.mxu0 0.0
    %438 = vmatprep.subr.mxu0 0.0
    %439 = vmatpush1.msra.mxu0 0.0
    %440 = vmatprep.subr.mxu0 0.0
    %441 = vmatpush1.msra.mxu0 0.0
    %442 = vmatprep.subr.mxu0 0.0
    %443 = vmatpush1.msra.mxu0 0.0
    %444 = vmatprep.subr.mxu0 0.0
    %445 = vmatpush1.msra.mxu0 0.0
    %446 = vmatprep.subr.mxu0 0.0
    %447 = vmatpush1.msra.mxu0 0.0
    %448 = vmatprep.mubr.f32.mxu0 0.0
    %449 = vmatmul.mubr.f32.gmra.mrb[0].mxu0 %v172
    %v450 = vpop.f32.mrb[0].mxu0
    %v451 = vadd.f32 %v381, %v450
    %v452 = vpop.f32.mrb[0].mxu0
    %453 = vdwg.mxu0
    %v454 = vmax.f32 %v451, 0.0
    %v455 = vld [vmem:[%s3] sm:$0xff]
    %v456 = vld [vmem:[%s3 + $0x8] sm:$0xff]
    %v457 = vld [vmem:[%s3 + $0x10] sm:$0xff]
    %v458 = vld [vmem:[%s3 + $0x18] sm:$0xff]
    %v459 = vld [vmem:[%s4] sm:$0x1]
    %v461 = vlaneseq
    %v462 = vshrl.u32 %v461, 7
    %v463 = vsub.s32 0, %v462
    %v464 = vrot.slane %v459, %v463
    %v467 = vsel %vm171, %v454, 0
    %469 = vmatprep.subr.mxu0 0.0
    %470 = vmatpush1.msra.mxu0 %v455
    %471 = vmatprep.subr.mxu0 0.0
    %472 = vmatpush1.msra.mxu0 %v456
    %473 = vmatprep.subr.mxu0 0.0
    %474 = vmatpush1.msra.mxu0 %v457
    %475 = vmatprep.subr.mxu0 0.0
    %476 = vmatpush1.msra.mxu0 %v458
    %477 = vmatprep.subr.mxu0 0.0
    %478 = vmatpush1.msra.mxu0 0.0
    %479 = vmatprep.subr.mxu0 0.0
    %480 = vmatpush1.msra.mxu0 0.0
    %481 = vmatprep.subr.mxu0 0.0
    %482 = vmatpush1.msra.mxu0 0.0
    %483 = vmatprep.subr.mxu0 0.0
    %484 = vmatpush1.msra.mxu0 0.0
    %485 = vmatprep.subr.mxu0 0.0
    %486 = vmatpush1.msra.mxu0 0.0
    %487 = vmatprep.subr.mxu0 0.0
    %488 = vmatpush1.msra.mxu0 0.0
    %489 = vmatprep.subr.mxu0 0.0
    %490 = vmatpush1.msra.mxu0 0.0
    %491 = vmatprep.subr.mxu0 0.0
    %492 = vmatpush1.msra.mxu0 0.0
    %493 = vmatprep.subr.mxu0 0.0
    %494 = vmatpush1.msra.mxu0 0.0
    %495 = vmatprep.subr.mxu0 0.0
    %496 = vmatpush1.msra.mxu0 0.0
    %497 = vmatprep.subr.mxu0 0.0
    %498 = vmatpush1.msra.mxu0 0.0
    %499 = vmatprep.subr.mxu0 0.0
    %500 = vmatpush1.msra.mxu0 0.0
    %501 = vmatprep.subr.mxu0 0.0
    %502 = vmatpush1.msra.mxu0 0.0
    %503 = vmatprep.subr.mxu0 0.0
    %504 = vmatpush1.msra.mxu0 0.0
    %505 = vmatprep.subr.mxu0 0.0
    %506 = vmatpush1.msra.mxu0 0.0
    %507 = vmatprep.subr.mxu0 0.0
    %508 = vmatpush1.msra.mxu0 0.0
    %509 = vmatprep.subr.mxu0 0.0
    %510 = vmatpush1.msra.mxu0 0.0
    %511 = vmatprep.subr.mxu0 0.0
    %512 = vmatpush1.msra.mxu0 0.0
    %513 = vmatprep.subr.mxu0 0.0
    %514 = vmatpush1.msra.mxu0 0.0
    %515 = vmatprep.subr.mxu0 0.0
    %516 = vmatpush1.msra.mxu0 0.0
    %517 = vmatprep.subr.mxu0 0.0
    %518 = vmatpush1.msra.mxu0 0.0
    %519 = vmatprep.subr.mxu0 0.0
    %520 = vmatpush1.msra.mxu0 0.0
    %521 = vmatprep.subr.mxu0 0.0
    %522 = vmatpush1.msra.mxu0 0.0
    %523 = vmatprep.subr.mxu0 0.0
    %524 = vmatpush1.msra.mxu0 0.0
    %525 = vmatprep.subr.mxu0 0.0
    %526 = vmatpush1.msra.mxu0 0.0
    %527 = vmatprep.subr.mxu0 0.0
    %528 = vmatpush1.msra.mxu0 0.0
    %529 = vmatprep.subr.mxu0 0.0
    %530 = vmatpush1.msra.mxu0 0.0
    %531 = vmatprep.subr.mxu0 0.0
    %532 = vmatpush1.msra.mxu0 0.0
    %533 = vmatprep.mubr.f32.mxu0 0.0
    %534 = vmatmul.mubr.f32.gmra.mrb[0].mxu0 %v467
    %v535 = vpop.f32.mrb[0].mxu0
    %v536 = vadd.f32 %v464, %v535
    %v537 = vpop.f32.mrb[0].mxu0
    %538 = vdwg.mxu0
    %vm539 = vcmask 9216
    %540 = vst.msk [vmem:[#allocation2] sm:$0x3] %vm539, %v536
    // Predicated region
    $region22: #{dqn_forward_pallas.5} parent=1 // pred_check
      _
    $region23: #{dqn_forward_pallas.5} parent=1 // pred_check_branch
      %542 = sbr.rel (0) target = $region25
    $region24: #{dqn_forward_pallas.5} parent=1 // pred_region
      %s544 = ssub.s32 32, 32
      %545 = vsyncadd [#allocation3], %s544
      %s547 = sshll.u32 [#allocation2], 4
      %s548 = int_to_ptr.vmem [resolvable:$true] %s547
      %550 = dma.vmem_to_hbm [thread:$0]  %s548, 32, %s5, [#allocation3]
    $region25: #{dqn_forward_pallas.5} parent=1 // pred_fallthru
      _
    // Predicated region
    $region26: #{dqn_forward_pallas.5} parent=1 // pred_check
      _
    $region27: #{dqn_forward_pallas.5} parent=1 // pred_check_branch
      %552 = sbr.rel (0) target = $region29
    $region28: #{dqn_forward_pallas.5} parent=1 // pred_region
      %553 = dma.done [#allocation3], 32
    $region29: #{dqn_forward_pallas.5} parent=1 // pred_fallthru
      _
    %554 = vsyncpa [#allocation3], 1

</llo_original>
